<compile_context>
chip_gen: v7x
topology: tpu7x:2x2x1
jax: 0.10.0
libtpu: 0.0.40
codegen_flags: <defaults>
</compile_context>

<pallas_src>
import functools

import jax
import jax.numpy as jnp
from jax import lax
from jax.experimental import pallas as pl
from jax.experimental.pallas import tpu as pltpu


def _cross_attn_kernel(x_ref, ctx_ref, wq_ref, wkv_ref, wo_ref, bq_ref, bkv_ref,
                       o_ref, q_scr, k_scr, v_scr, o_scr,
                       *, heads, dim_head, scale):
    hidden = heads * dim_head

    x = x_ref[0]      # (Cq, N) bf16, channel-major (native NCHW flatten)
    ctx = ctx_ref[0]  # (Cc, N) bf16

    # Fused 1x1-conv projections, canonical MXU orientation (M=hidden, K=C, N=N).
    q_all = jnp.dot(wq_ref[...], x, preferred_element_type=jnp.float32)
    q_all = (q_all + bq_ref[...]) * scale            # fold scale into q: O(hidden*N)
    q_scr[...] = q_all.astype(jnp.bfloat16)          # (hidden, N)

    kv_all = jnp.dot(wkv_ref[...], ctx, preferred_element_type=jnp.float32)
    kv_all = (kv_all + bkv_ref[...]).astype(jnp.bfloat16)   # (2*hidden, N)
    k_scr[...] = kv_all[:hidden, :]                  # static, sublane-aligned slices
    v_scr[...] = kv_all[hidden:, :]

    # Rolled loop over heads bounds the live range of the (N, N) softmax
    # temporaries to a single head (matters as N grows / under v7x's 64 MiB VMEM).
    @pl.loop(0, heads)
    def _(h):
        s = pl.multiple_of(h * dim_head, dim_head)
        q_h = q_scr[pl.ds(s, dim_head), :]           # (dh, N) bf16, sublane slice
        k_h = k_scr[pl.ds(s, dim_head), :]
        v_h = v_scr[pl.ds(s, dim_head), :]

        # sim[i, j] = sum_d q_h[d, i] * k_h[d, j]  (contract leading dims; TN form)
        sim = lax.dot_general(q_h, k_h, (((0,), (0,)), ((), ())),
                              preferred_element_type=jnp.float32)   # (Nq, Nk) f32
        sim = sim - jnp.max(sim, axis=-1, keepdims=True)
        p = jnp.exp(sim)
        l = jnp.sum(p, axis=-1, keepdims=True)       # (Nq, 1) f32
        # Normalize here (lane-broadcast of the exact f32 reciprocal): avoids
        # the (N,1)->(1,N) relayout a deferred normalization of the (dh, Nq)
        # output would require, and keeps only one quantization source (bf16 p).
        p = (p * pl.reciprocal(l, approx=False)).astype(jnp.bfloat16)

        # o_h[d, i] = sum_j v_h[d, j] * p[i, j]  (contract last dims; NT form)
        o_h = lax.dot_general(v_h, p, (((1,), (1,)), ((), ())),
                              preferred_element_type=jnp.float32)   # (dh, Nq) f32
        o_scr[pl.ds(s, dim_head), :] = o_h.astype(jnp.bfloat16)

    # Single fused output projection over all heads: (Cq, hidden) @ (hidden, N).
    # Lane-dense (N = 256 lanes) store, already NCHW-ordered.
    o_ref[0] = jnp.dot(wo_ref[...], o_scr[...],
                       preferred_element_type=jnp.float32)          # (Cq, N) f32


def cross_attention_pallas(x, context, params, *, heads, dim_head):
    b, cq, h, w = x.shape
    _, cc, hc, wc = context.shape
    if (hc, wc) != (h, w):
        # Matches torch F.interpolate(mode='bilinear', align_corners=False):
        # half-pixel centers, NO antialiasing (antialias=True would diverge on
        # downsampling paths).
        context = jax.image.resize(context, (b, cc, h, w), method='bilinear',
                                   antialias=False)

    n = h * w
    hidden = heads * dim_head
    scale = float(dim_head) ** -0.5

    # NCHW is already channel-major: a free reshape gives (B, C, N) with N on
    # the lane axis. No wrapper transposes.
    x_cn = x.reshape(b, cq, n).astype(jnp.bfloat16)
    ctx_cn = context.reshape(b, cc, n).astype(jnp.bfloat16)

    wq = params['wq'].astype(jnp.bfloat16)            # (hidden, cq)
    wkv = params['wkv'].astype(jnp.bfloat16)          # (2*hidden, cc)
    wo = params['wo'].astype(jnp.bfloat16)            # (cq, hidden)
    bq = params['bq'].reshape(hidden, 1).astype(jnp.float32)
    bkv = params['bkv'].reshape(2 * hidden, 1).astype(jnp.float32)

    out_cn = pl.pallas_call(
        functools.partial(_cross_attn_kernel, heads=heads, dim_head=dim_head,
                          scale=scale),
        out_shape=jax.ShapeDtypeStruct((b, cq, n), jnp.float32),
        grid_spec=pltpu.PrefetchScalarGridSpec(
            num_scalar_prefetch=0,
            grid=(b,),
            in_specs=[
                pl.BlockSpec((1, cq, n), lambda i: (i, 0, 0)),      # x   (channel-major)
                pl.BlockSpec((1, cc, n), lambda i: (i, 0, 0)),      # context
                # Whole-array weight/bias blocks with constant block indices:
                # DMA'd once, not re-fetched per grid step.
                pl.BlockSpec((hidden, cq), lambda i: (0, 0)),       # wq
                pl.BlockSpec((2 * hidden, cc), lambda i: (0, 0)),   # wkv
                pl.BlockSpec((cq, hidden), lambda i: (0, 0)),       # wo
                pl.BlockSpec((hidden, 1), lambda i: (0, 0)),        # bq
                pl.BlockSpec((2 * hidden, 1), lambda i: (0, 0)),    # bkv
            ],
            out_specs=pl.BlockSpec((1, cq, n), lambda i: (i, 0, 0)),
            scratch_shapes=[
                pltpu.VMEM((hidden, n), jnp.bfloat16),   # q (pre-scaled)
                pltpu.VMEM((hidden, n), jnp.bfloat16),   # k
                pltpu.VMEM((hidden, n), jnp.bfloat16),   # v
                pltpu.VMEM((hidden, n), jnp.bfloat16),   # per-head outputs
            ],
        ),
        compiler_params=pltpu.CompilerParams(
            dimension_semantics=("parallel",)),
    )(x_cn, ctx_cn, wq, wkv, wo, bq, bkv)

    # residual + output-projection bias in f32 (fused by XLA); the kernel
    # output is already channel-major/NCHW-ordered, so only a free reshape.
    return out_cn.reshape(b, cq, h, w) + params['bo'][None, :, None, None] + x


def cross_attention_ref(x, context, params, *, heads, dim_head):
    """Pure-JAX f32 reference, mirrors the PyTorch forward exactly."""
    b, cq, h, w = x.shape
    _, cc, hc, wc = context.shape
    if (hc, wc) != (h, w):
        context = jax.image.resize(context, (b, cc, h, w), method='bilinear',
                                   antialias=False)
    hidden = heads * dim_head
    q = jnp.einsum('oc,bchw->bohw', params['wq'], x) + params['bq'][None, :, None, None]
    kv = jnp.einsum('oc,bchw->bohw', params['wkv'], context) + params['bkv'][None, :, None, None]
    k, v = kv[:, :hidden], kv[:, hidden:]
    n = h * w
    q = q.reshape(b, heads, dim_head, n).transpose(0, 1, 3, 2)   # (b,H,n,dh)
    k = k.reshape(b, heads, dim_head, n)                         # (b,H,dh,n)
    v = v.reshape(b, heads, dim_head, n).transpose(0, 1, 3, 2)   # (b,H,n,dh)
    sim = jnp.einsum('bhnd,bhdm->bhnm', q, k) * (float(dim_head) ** -0.5)
    attn = jax.nn.softmax(sim, axis=-1)
    out = jnp.einsum('bhnm,bhmd->bhnd', attn, v)
    out = out.transpose(0, 1, 3, 2).reshape(b, hidden, h, w)
    out = jnp.einsum('oc,bchw->bohw', params['wo'], out) + params['bo'][None, :, None, None]
    return out + x


def init_params(key, query_dim, context_dim, heads, dim_head):
    """Deterministic kaiming_normal init (kernel=1 => fan_in = in_channels);
    init_bias=0 => biases are zero (kept for semantic fidelity)."""
    hidden = heads * dim_head
    k1, k2, k3 = jax.random.split(key, 3)
    wq = (1.0 / query_dim) ** 0.5 * jax.random.normal(k1, (hidden, query_dim), jnp.float32)
    wkv = (1.0 / context_dim) ** 0.5 * jax.random.normal(k2, (2 * hidden, context_dim), jnp.float32)
    wo = (1.0 / hidden) ** 0.5 * jax.random.normal(k3, (query_dim, hidden), jnp.float32)
    return dict(
        wq=wq, wkv=wkv, wo=wo,
        bq=jnp.zeros((hidden,), jnp.float32),
        bkv=jnp.zeros((2 * hidden,), jnp.float32),
        bo=jnp.zeros((query_dim,), jnp.float32),
    )


if __name__ == "__main__":
    query_dim, context_dim = 4, 6
    heads, dim_head = 4, 32
    b, h, w = 2, 16, 16

    key = jax.random.PRNGKey(0)
    kx, kc, kp = jax.random.split(key, 3)
    x = jax.random.normal(kx, (b, query_dim, h, w), jnp.float32)
    # context at a different spatial size to exercise the bilinear-resize glue path
    context = jax.random.normal(kc, (b, context_dim, 8, 8), jnp.float32)
    params = init_params(kp, query_dim, context_dim, heads, dim_head)

    out = cross_attention_pallas(x, context, params, heads=heads, dim_head=dim_head)
    out = jax.block_until_ready(out)

    ref = cross_attention_ref(x, context, params, heads=heads, dim_head=dim_head)
    ref = jax.block_until_ready(ref)

    assert out.shape == x.shape and out.dtype == jnp.float32
    # bf16 MXU inputs (projections / attention probs) vs a pure-f32 reference
    # -> expected ~1e-2-scale deviation, hence the relaxed tolerance.
    max_err = float(jnp.max(jnp.abs(out - ref)))
    assert max_err < 5e-2, f"mismatch: max abs err {max_err}"

    print("KERNEL_OK")
</pallas_src>

<mosaic_0001>
module attributes {stable_mosaic.version = 11 : i64} {
  func.func @_cross_attn_kernel(%arg0: i32, %arg1: memref<1x4x256xbf16, #tpu.memory_space<vmem>>, %arg2: memref<1x6x256xbf16, #tpu.memory_space<vmem>>, %arg3: memref<128x4xbf16, #tpu.memory_space<vmem>>, %arg4: memref<256x6xbf16, #tpu.memory_space<vmem>>, %arg5: memref<4x128xbf16, #tpu.memory_space<vmem>>, %arg6: memref<128x1xf32, #tpu.memory_space<vmem>>, %arg7: memref<256x1xf32, #tpu.memory_space<vmem>>, %arg8: memref<1x4x256xf32, #tpu.memory_space<vmem>>, %arg9: memref<128x256xbf16, #tpu.memory_space<vmem>>, %arg10: memref<128x256xbf16, #tpu.memory_space<vmem>>, %arg11: memref<128x256xbf16, #tpu.memory_space<vmem>>, %arg12: memref<128x256xbf16, #tpu.memory_space<vmem>>) attributes {dimension_semantics = [#tpu.dimension_semantics<parallel>], iteration_bounds = array<i64: 2>, scalar_prefetch = 0 : i64, scratch_operands = 4 : i64, tpu.core_type = #tpu.core_type<tc>, window_params = [{transform_indices = @transform_0, window_bounds = array<i64: 1, 4, 256>}, {transform_indices = @transform_1, window_bounds = array<i64: 1, 6, 256>}, {pipeline_mode = #tpu.pipeline_mode<synchronous>, transform_indices = @transform_2, window_bounds = array<i64: 128, 4>}, {pipeline_mode = #tpu.pipeline_mode<synchronous>, transform_indices = @transform_3, window_bounds = array<i64: 256, 6>}, {pipeline_mode = #tpu.pipeline_mode<synchronous>, transform_indices = @transform_4, window_bounds = array<i64: 4, 128>}, {pipeline_mode = #tpu.pipeline_mode<synchronous>, transform_indices = @transform_5, window_bounds = array<i64: 128, 1>}, {pipeline_mode = #tpu.pipeline_mode<synchronous>, transform_indices = @transform_6, window_bounds = array<i64: 256, 1>}, {transform_indices = @transform_7, window_bounds = array<i64: 1, 4, 256>}]} {
    %c0 = arith.constant 0 : index
    %c0_0 = arith.constant 0 : index
    %c0_1 = arith.constant 0 : index
    %0 = vector.load %arg1[%c0, %c0_0, %c0_1] : memref<1x4x256xbf16, #tpu.memory_space<vmem>>, vector<1x4x256xbf16>
    %1 = vector.shape_cast %0 : vector<1x4x256xbf16> to vector<4x256xbf16>
    %c0_2 = arith.constant 0 : index
    %c0_3 = arith.constant 0 : index
    %c0_4 = arith.constant 0 : index
    %2 = vector.load %arg2[%c0_2, %c0_3, %c0_4] : memref<1x6x256xbf16, #tpu.memory_space<vmem>>, vector<1x6x256xbf16>
    %3 = vector.shape_cast %2 : vector<1x6x256xbf16> to vector<6x256xbf16>
    %c0_5 = arith.constant 0 : index
    %c0_6 = arith.constant 0 : index
    %4 = vector.load %arg3[%c0_5, %c0_6] : memref<128x4xbf16, #tpu.memory_space<vmem>>, vector<128x4xbf16>
    %cst = arith.constant dense<0.000000e+00> : vector<128x256xf32>
    %5 = tpu.matmul %4, %1, %cst {dimension_numbers = #tpu.dot_dimension_numbers<[1], [0], [0], [1], [0, 0, 1, 1], [], []>} : vector<128x4xbf16>, vector<4x256xbf16>, vector<128x256xf32> -> vector<128x256xf32>
    %c0_7 = arith.constant 0 : index
    %c0_8 = arith.constant 0 : index
    %6 = vector.load %arg6[%c0_7, %c0_8] : memref<128x1xf32, #tpu.memory_space<vmem>>, vector<128x1xf32>
    %7 = vector.broadcast %6 : vector<128x1xf32> to vector<128x256xf32>
    %8 = arith.addf %5, %7 : vector<128x256xf32>
    %cst_9 = arith.constant 0.176776692 : f32
    %9 = vector.broadcast %cst_9 : f32 to vector<128x256xf32>
    %10 = arith.mulf %8, %9 : vector<128x256xf32>
    %11 = arith.truncf %10 : vector<128x256xf32> to vector<128x256xbf16>
    %c0_10 = arith.constant 0 : index
    %c0_11 = arith.constant 0 : index
    %12 = vector.load %arg9[%c0_10, %c0_11] : memref<128x256xbf16, #tpu.memory_space<vmem>>, vector<128x256xbf16>
    tpu.vector_store %arg9[%c0_10, %c0_11], %11 {strides = array<i32>} : memref<128x256xbf16, #tpu.memory_space<vmem>>, vector<128x256xbf16>,
    %c0_12 = arith.constant 0 : index
    %c0_13 = arith.constant 0 : index
    %13 = vector.load %arg4[%c0_12, %c0_13] : memref<256x6xbf16, #tpu.memory_space<vmem>>, vector<256x6xbf16>
    %cst_14 = arith.constant dense<0.000000e+00> : vector<256x256xf32>
    %14 = tpu.matmul %13, %3, %cst_14 {dimension_numbers = #tpu.dot_dimension_numbers<[1], [0], [0], [1], [0, 0, 1, 1], [], []>} : vector<256x6xbf16>, vector<6x256xbf16>, vector<256x256xf32> -> vector<256x256xf32>
    %c0_15 = arith.constant 0 : index
    %c0_16 = arith.constant 0 : index
    %15 = vector.load %arg7[%c0_15, %c0_16] : memref<256x1xf32, #tpu.memory_space<vmem>>, vector<256x1xf32>
    %16 = vector.broadcast %15 : vector<256x1xf32> to vector<256x256xf32>
    %17 = arith.addf %14, %16 : vector<256x256xf32>
    %18 = arith.truncf %17 : vector<256x256xf32> to vector<256x256xbf16>
    %19 = vector.extract_strided_slice %18 {offsets = [0, 0], sizes = [128, 256], strides = [1, 1]} : vector<256x256xbf16> to vector<128x256xbf16>
    %c0_17 = arith.constant 0 : index
    %c0_18 = arith.constant 0 : index
    %20 = vector.load %arg10[%c0_17, %c0_18] : memref<128x256xbf16, #tpu.memory_space<vmem>>, vector<128x256xbf16>
    tpu.vector_store %arg10[%c0_17, %c0_18], %19 {strides = array<i32>} : memref<128x256xbf16, #tpu.memory_space<vmem>>, vector<128x256xbf16>,
    %21 = vector.extract_strided_slice %18 {offsets = [128, 0], sizes = [128, 256], strides = [1, 1]} : vector<256x256xbf16> to vector<128x256xbf16>
    %c0_19 = arith.constant 0 : index
    %c0_20 = arith.constant 0 : index
    %22 = vector.load %arg11[%c0_19, %c0_20] : memref<128x256xbf16, #tpu.memory_space<vmem>>, vector<128x256xbf16>
    tpu.vector_store %arg11[%c0_19, %c0_20], %21 {strides = array<i32>} : memref<128x256xbf16, #tpu.memory_space<vmem>>, vector<128x256xbf16>,
    %c0_i32 = arith.constant 0 : i32
    %c4_i32 = arith.constant 4 : i32
    %23 = arith.addi %c0_i32, %c4_i32 : i32
    %c1_i32 = arith.constant 1 : i32
    scf.for %arg13 = %c0_i32 to %23 step %c1_i32  : i32 {
      %c1_i32_30 = arith.constant 1 : i32
      %30 = arith.muli %arg13, %c1_i32_30 : i32
      %c0_i32_31 = arith.constant 0 : i32
      %31 = arith.addi %c0_i32_31, %30 : i32
      %c32_i32 = arith.constant 32 : i32
      %32 = arith.muli %31, %c32_i32 : i32
      %33 = tpu.assume_multiple %32, 32 : i32
      %34 = arith.index_cast %33 : i32 to index
      %c0_32 = arith.constant 0 : index
      %35 = vector.load %arg9[%34, %c0_32] : memref<128x256xbf16, #tpu.memory_space<vmem>>, vector<32x256xbf16>
      %36 = arith.index_cast %33 : i32 to index
      %c0_33 = arith.constant 0 : index
      %37 = vector.load %arg10[%36, %c0_33] : memref<128x256xbf16, #tpu.memory_space<vmem>>, vector<32x256xbf16>
      %38 = arith.index_cast %33 : i32 to index
      %c0_34 = arith.constant 0 : index
      %39 = vector.load %arg11[%38, %c0_34] : memref<128x256xbf16, #tpu.memory_space<vmem>>, vector<32x256xbf16>
      %cst_35 = arith.constant dense<0.000000e+00> : vector<256x256xf32>
      %40 = tpu.matmul %35, %37, %cst_35 {dimension_numbers = #tpu.dot_dimension_numbers<[0], [0], [1], [1], [0, 1, 1, 1], [], []>} : vector<32x256xbf16>, vector<32x256xbf16>, vector<256x256xf32> -> vector<256x256xf32>
      %cst_36 = arith.constant dense<0xFF800000> : vector<256xf32>
      %41 = vector.multi_reduction <maximumf>, %40, %cst_36 [1] : vector<256x256xf32> to vector<256xf32>
      %42 = vector.shape_cast %41 : vector<256xf32> to vector<256x1xf32>
      %43 = vector.broadcast %42 : vector<256x1xf32> to vector<256x256xf32>
      %44 = arith.subf %40, %43 : vector<256x256xf32>
      %45 = math.exp %44 : vector<256x256xf32>
      %cst_37 = arith.constant dense<0.000000e+00> : vector<256xf32>
      %46 = vector.multi_reduction <add>, %45, %cst_37 [1] : vector<256x256xf32> to vector<256xf32>
      %47 = vector.shape_cast %46 : vector<256xf32> to vector<256x1xf32>
      %48 = tpu.reciprocal %47 : vector<256x1xf32> -> vector<256x1xf32>
      %49 = vector.broadcast %48 : vector<256x1xf32> to vector<256x256xf32>
      %50 = arith.mulf %45, %49 : vector<256x256xf32>
      %51 = arith.truncf %50 : vector<256x256xf32> to vector<256x256xbf16>
      %cst_38 = arith.constant dense<0.000000e+00> : vector<32x256xf32>
      %52 = tpu.matmul %39, %51, %cst_38 {dimension_numbers = #tpu.dot_dimension_numbers<[1], [1], [0], [0], [0, 0, 1, 0], [], []>} : vector<32x256xbf16>, vector<256x256xbf16>, vector<32x256xf32> -> vector<32x256xf32>
      %53 = arith.truncf %52 : vector<32x256xf32> to vector<32x256xbf16>
      %54 = arith.index_cast %33 : i32 to index
      %c0_39 = arith.constant 0 : index
      %55 = vector.load %arg12[%54, %c0_39] : memref<128x256xbf16, #tpu.memory_space<vmem>>, vector<32x256xbf16>
      tpu.vector_store %arg12[%54, %c0_39], %53 {strides = array<i32>} : memref<128x256xbf16, #tpu.memory_space<vmem>>, vector<32x256xbf16>,
    }
    %c4_i32_21 = arith.constant 4 : i32
    %c0_22 = arith.constant 0 : index
    %c0_23 = arith.constant 0 : index
    %24 = vector.load %arg5[%c0_22, %c0_23] : memref<4x128xbf16, #tpu.memory_space<vmem>>, vector<4x128xbf16>
    %c0_24 = arith.constant 0 : index
    %c0_25 = arith.constant 0 : index
    %25 = vector.load %arg12[%c0_24, %c0_25] : memref<128x256xbf16, #tpu.memory_space<vmem>>, vector<128x256xbf16>
    %cst_26 = arith.constant dense<0.000000e+00> : vector<4x256xf32>
    %26 = tpu.matmul %24, %25, %cst_26 {dimension_numbers = #tpu.dot_dimension_numbers<[1], [0], [0], [1], [0, 0, 1, 1], [], []>} : vector<4x128xbf16>, vector<128x256xbf16>, vector<4x256xf32> -> vector<4x256xf32>
    %c0_27 = arith.constant 0 : index
    %c0_28 = arith.constant 0 : index
    %c0_29 = arith.constant 0 : index
    %27 = vector.load %arg8[%c0_27, %c0_28, %c0_29] : memref<1x4x256xf32, #tpu.memory_space<vmem>>, vector<1x4x256xf32>
    %28 = vector.shape_cast %27 : vector<1x4x256xf32> to vector<4x256xf32>
    %29 = vector.shape_cast %26 : vector<4x256xf32> to vector<1x4x256xf32>
    tpu.vector_store %arg8[%c0_27, %c0_28, %c0_29], %29 {strides = array<i32>} : memref<1x4x256xf32, #tpu.memory_space<vmem>>, vector<1x4x256xf32>,
    return
  }
  func.func @transform_0(%arg0: i32) -> (i32, i32, i32) {
    %c0_i32 = arith.constant 0 : i32
    %c0_i32_0 = arith.constant 0 : i32
    %c0_i32_1 = arith.constant 0 : i32
    return %arg0, %c0_i32, %c0_i32_0 : i32, i32, i32
  }
  func.func @transform_1(%arg0: i32) -> (i32, i32, i32) {
    %c0_i32 = arith.constant 0 : i32
    %c0_i32_0 = arith.constant 0 : i32
    %c0_i32_1 = arith.constant 0 : i32
    return %arg0, %c0_i32, %c0_i32_0 : i32, i32, i32
  }
  func.func @transform_2(%arg0: i32) -> (i32, i32) {
    %c0_i32 = arith.constant 0 : i32
    %c0_i32_0 = arith.constant 0 : i32
    %c0_i32_1 = arith.constant 0 : i32
    return %c0_i32, %c0_i32_0 : i32, i32
  }
  func.func @transform_3(%arg0: i32) -> (i32, i32) {
    %c0_i32 = arith.constant 0 : i32
    %c0_i32_0 = arith.constant 0 : i32
    %c0_i32_1 = arith.constant 0 : i32
    return %c0_i32, %c0_i32_0 : i32, i32
  }
  func.func @transform_4(%arg0: i32) -> (i32, i32) {
    %c0_i32 = arith.constant 0 : i32
    %c0_i32_0 = arith.constant 0 : i32
    %c0_i32_1 = arith.constant 0 : i32
    return %c0_i32, %c0_i32_0 : i32, i32
  }
  func.func @transform_5(%arg0: i32) -> (i32, i32) {
    %c0_i32 = arith.constant 0 : i32
    %c0_i32_0 = arith.constant 0 : i32
    %c0_i32_1 = arith.constant 0 : i32
    return %c0_i32, %c0_i32_0 : i32, i32
  }
  func.func @transform_6(%arg0: i32) -> (i32, i32) {
    %c0_i32 = arith.constant 0 : i32
    %c0_i32_0 = arith.constant 0 : i32
    %c0_i32_1 = arith.constant 0 : i32
    return %c0_i32, %c0_i32_0 : i32, i32
  }
  func.func @transform_7(%arg0: i32) -> (i32, i32, i32) {
    %c0_i32 = arith.constant 0 : i32
    %c0_i32_0 = arith.constant 0 : i32
    %c0_i32_1 = arith.constant 0 : i32
    return %arg0, %c0_i32, %c0_i32_0 : i32, i32, i32
  }
}

</mosaic_0001>

<llo_original>
// kernel: tpu_custom_call.1
$region0: #{tpu_custom_call.1}
  #allocation0 [shape = 'u32[]', space=smem, size = 0x4, offset = 0x4, fixed_abs, tag = 'smem constant byte address 0x4 - core index']
  #allocation1 [shape = 'u32[144,128]{1,0:T(1,128)}', space=vmem, size = 0x12000, scoped, tag = 'internal scratch']
  #allocation2 [shape = 'bf16[128,256]{1,0:T(16,128)(2,1)}', space=vmem, size = 0x10000, scoped, tag = 'scratch operand']
  #allocation3 [shape = 'bf16[128,256]{1,0:T(16,128)(2,1)}', space=vmem, size = 0x10000, scoped, tag = 'scratch operand']
  #allocation4 [shape = 'bf16[128,256]{1,0:T(16,128)(2,1)}', space=vmem, size = 0x10000, scoped, tag = 'scratch operand']
  #allocation5 [shape = 'bf16[128,256]{1,0:T(16,128)(2,1)}', space=vmem, size = 0x10000, scoped, tag = 'scratch operand']
  %s0 = inlined_call_operand.vmem [shape: bf16[2,4,256], index: 0, kind: input, shape index: {}]
  %s1 = inlined_call_operand.vmem [shape: bf16[2,6,256], index: 1, kind: input, shape index: {}]
  %s2 = inlined_call_operand.vmem [shape: bf16[128,4], index: 2, kind: input, shape index: {}]
  %s3 = inlined_call_operand.vmem [shape: bf16[256,6], index: 3, kind: input, shape index: {}]
  %s4 = inlined_call_operand.vmem [shape: bf16[4,128], index: 4, kind: input, shape index: {}]
  %s5 = inlined_call_operand.vmem [shape: f32[128,1], index: 5, kind: input, shape index: {}]
  %s6 = inlined_call_operand.vmem [shape: f32[256,1], index: 6, kind: input, shape index: {}]
  %s7 = inlined_call_operand.hbm [shape: f32[2,4,256], index: 7, kind: output, shape index: {}]
  %s8 = sld [smem:[#allocation0]]
  $region68: #{tpu_custom_call.1} parent=0
    _
  %s10 = ssub.s32 1, %s8
  %s11 = scalar_select 0, %s10, %s8
  $region1: #{tpu_custom_call.1} parent=0
    #allocation6 [shape = 'u8[8192]{0}', space=vmem, size = 0x2000, scoped, tag = 'output window, operand 0']
    #allocation7 [shape = 's32[2]{0}', space=sflag, size = 0x8, scoped, tag = 'scoped memory for tpu_custom_call.1']
    %12 = vsyncpa [#allocation7], 0
    %s13 = scalar_lea.sflag [#allocation7], 1
    %14 = vsyncpa %s13, 0
    loop: start=0, step=1, limit=4
    $region2: #{tpu_custom_call.1} parent=1 // loop_pre_header
      _
    $region3: #{tpu_custom_call.1} parent=1 // loop_header
      %s16 = sphi 0, %s20
      %p17 = scmp.ge.s32.totalorder %s16, 4
      %s26 = sphi 0, %s28
      %s29 = sphi 0, %s26
      %s30 = sphi 0, %s29
      %s46 = sphi 0, %s30
      %s52 = sphi 0, %s54
      %s55 = sphi 0, %s52
      %s56 = sphi 0, %s55
      %s72 = sphi 0, %s56
      %s76 = sphi 0, %s76
      %s78 = sphi 0, %s76
      %s79 = sphi 0, %s78
      %s93 = sphi 0, %s79
      %s97 = sphi 0, %s97
      %s99 = sphi 0, %s97
      %s100 = sphi 0, %s99
      %s114 = sphi 0, %s100
      %s118 = sphi 0, %s118
      %s120 = sphi 0, %s118
      %s121 = sphi 0, %s120
      %s135 = sphi 0, %s121
      %s139 = sphi 0, %s139
      %s141 = sphi 0, %s139
      %s142 = sphi 0, %s141
      %s156 = sphi 0, %s142
      %s160 = sphi 0, %s160
      %s162 = sphi 0, %s160
      %s163 = sphi 0, %s162
      %s177 = sphi 0, %s163
      %s183 = sphi 0, %s185
      %s186 = sphi 0, %s183
      %s187 = sphi 0, %s186
      %s203 = sphi 0, %s187
    $region4: #{tpu_custom_call.1} parent=1 // loop_header_branch
      %19 = sbr.rel (%p17) target = $region8
    $region5: #{tpu_custom_call.1} parent=1 // loop_body
      %s21 = ssub.s32 %s16, 1
      %s22 = ssub.s32 %s16, 2
      %s23 = sadd.s32 %s16, 1
      %s24 = ssub.s32 %s16, %s23
      %p25 = scmp.eq.s32.totalorder %s24, 0
      %s27 = sadd.s32 %s26, 1
      %s28 = scalar_select %p25, %s26, %s27
      %p31 = pneg %p25
      %p32 = scmp.eq.s32.totalorder %s16, 1
      %p33 = por %p31, %p32
      %p34 = scmp.ne.s32.totalorder %s26, %s29
      %p35 = scmp.eq.s32.totalorder %s16, 0
      %p36 = por %p34, %p35
      %p37 = scmp.ne.s32.totalorder %s26, %s29
      %p38 = scmp.eq.s32.totalorder %s21, 1
      %p39 = por %p37, %p38
      %p40 = scmp.ne.s32.totalorder %s29, %s30
      %p41 = scmp.eq.s32.totalorder %s21, 0
      %p42 = por %p40, %p41
      %p43 = scmp.ne.s32.totalorder %s29, %s30
      %p44 = scmp.eq.s32.totalorder %s22, 1
      %p45 = por %p43, %p44
      %p47 = scmp.ne.s32.totalorder %s30, %s46
      %p48 = scmp.eq.s32.totalorder %s22, 0
      %p49 = por %p47, %p48
      %s50 = ssub.s32 %s16, %s23
      %p51 = scmp.eq.s32.totalorder %s50, 0
      %s53 = sadd.s32 %s52, 1
      %s54 = scalar_select %p51, %s52, %s53
      %p57 = pneg %p51
      %p58 = scmp.eq.s32.totalorder %s16, 1
      %p59 = por %p57, %p58
      %p60 = scmp.ne.s32.totalorder %s52, %s55
      %p61 = scmp.eq.s32.totalorder %s16, 0
      %p62 = por %p60, %p61
      %p63 = scmp.ne.s32.totalorder %s52, %s55
      %p64 = scmp.eq.s32.totalorder %s21, 1
      %p65 = por %p63, %p64
      %p66 = scmp.ne.s32.totalorder %s55, %s56
      %p67 = scmp.eq.s32.totalorder %s21, 0
      %p68 = por %p66, %p67
      %p69 = scmp.ne.s32.totalorder %s55, %s56
      %p70 = scmp.eq.s32.totalorder %s22, 1
      %p71 = por %p69, %p70
      %p73 = scmp.ne.s32.totalorder %s56, %s72
      %p74 = scmp.eq.s32.totalorder %s22, 0
      %p75 = por %p73, %p74
      %s77 = sadd.s32 %s76, 1
      %p80 = scmp.eq.s32.totalorder %s16, 1
      %p81 = scmp.ne.s32.totalorder %s76, %s78
      %p82 = scmp.eq.s32.totalorder %s16, 0
      %p83 = por %p81, %p82
      %p84 = scmp.ne.s32.totalorder %s76, %s78
      %p85 = scmp.eq.s32.totalorder %s21, 1
      %p86 = por %p84, %p85
      %p87 = scmp.ne.s32.totalorder %s78, %s79
      %p88 = scmp.eq.s32.totalorder %s21, 0
      %p89 = por %p87, %p88
      %p90 = scmp.ne.s32.totalorder %s78, %s79
      %p91 = scmp.eq.s32.totalorder %s22, 1
      %p92 = por %p90, %p91
      %p94 = scmp.ne.s32.totalorder %s79, %s93
      %p95 = scmp.eq.s32.totalorder %s22, 0
      %p96 = por %p94, %p95
      %s98 = sadd.s32 %s97, 1
      %p101 = scmp.eq.s32.totalorder %s16, 1
      %p102 = scmp.ne.s32.totalorder %s97, %s99
      %p103 = scmp.eq.s32.totalorder %s16, 0
      %p104 = por %p102, %p103
      %p105 = scmp.ne.s32.totalorder %s97, %s99
      %p106 = scmp.eq.s32.totalorder %s21, 1
      %p107 = por %p105, %p106
      %p108 = scmp.ne.s32.totalorder %s99, %s100
      %p109 = scmp.eq.s32.totalorder %s21, 0
      %p110 = por %p108, %p109
      %p111 = scmp.ne.s32.totalorder %s99, %s100
      %p112 = scmp.eq.s32.totalorder %s22, 1
      %p113 = por %p111, %p112
      %p115 = scmp.ne.s32.totalorder %s100, %s114
      %p116 = scmp.eq.s32.totalorder %s22, 0
      %p117 = por %p115, %p116
      %s119 = sadd.s32 %s118, 1
      %p122 = scmp.eq.s32.totalorder %s16, 1
      %p123 = scmp.ne.s32.totalorder %s118, %s120
      %p124 = scmp.eq.s32.totalorder %s16, 0
      %p125 = por %p123, %p124
      %p126 = scmp.ne.s32.totalorder %s118, %s120
      %p127 = scmp.eq.s32.totalorder %s21, 1
      %p128 = por %p126, %p127
      %p129 = scmp.ne.s32.totalorder %s120, %s121
      %p130 = scmp.eq.s32.totalorder %s21, 0
      %p131 = por %p129, %p130
      %p132 = scmp.ne.s32.totalorder %s120, %s121
      %p133 = scmp.eq.s32.totalorder %s22, 1
      %p134 = por %p132, %p133
      %p136 = scmp.ne.s32.totalorder %s121, %s135
      %p137 = scmp.eq.s32.totalorder %s22, 0
      %p138 = por %p136, %p137
      %s140 = sadd.s32 %s139, 1
      %p143 = scmp.eq.s32.totalorder %s16, 1
      %p144 = scmp.ne.s32.totalorder %s139, %s141
      %p145 = scmp.eq.s32.totalorder %s16, 0
      %p146 = por %p144, %p145
      %p147 = scmp.ne.s32.totalorder %s139, %s141
      %p148 = scmp.eq.s32.totalorder %s21, 1
      %p149 = por %p147, %p148
      %p150 = scmp.ne.s32.totalorder %s141, %s142
      %p151 = scmp.eq.s32.totalorder %s21, 0
      %p152 = por %p150, %p151
      %p153 = scmp.ne.s32.totalorder %s141, %s142
      %p154 = scmp.eq.s32.totalorder %s22, 1
      %p155 = por %p153, %p154
      %p157 = scmp.ne.s32.totalorder %s142, %s156
      %p158 = scmp.eq.s32.totalorder %s22, 0
      %p159 = por %p157, %p158
      %s161 = sadd.s32 %s160, 1
      %p164 = scmp.eq.s32.totalorder %s16, 1
      %p165 = scmp.ne.s32.totalorder %s160, %s162
      %p166 = scmp.eq.s32.totalorder %s16, 0
      %p167 = por %p165, %p166
      %p168 = scmp.ne.s32.totalorder %s160, %s162
      %p169 = scmp.eq.s32.totalorder %s21, 1
      %p170 = por %p168, %p169
      %p171 = scmp.ne.s32.totalorder %s162, %s163
      %p172 = scmp.eq.s32.totalorder %s21, 0
      %p173 = por %p171, %p172
      %p174 = scmp.ne.s32.totalorder %s162, %s163
      %p175 = scmp.eq.s32.totalorder %s22, 1
      %p176 = por %p174, %p175
      %p178 = scmp.ne.s32.totalorder %s163, %s177
      %p179 = scmp.eq.s32.totalorder %s22, 0
      %p180 = por %p178, %p179
      %s181 = ssub.s32 %s16, %s23
      %p182 = scmp.eq.s32.totalorder %s181, 0
      %s184 = sadd.s32 %s183, 1
      %s185 = scalar_select %p182, %s183, %s184
      %p188 = pneg %p182
      %p189 = scmp.eq.s32.totalorder %s16, 1
      %p190 = por %p188, %p189
      %p191 = scmp.ne.s32.totalorder %s183, %s186
      %p192 = scmp.eq.s32.totalorder %s16, 0
      %p193 = por %p191, %p192
      %p194 = scmp.ne.s32.totalorder %s183, %s186
      %p195 = scmp.eq.s32.totalorder %s21, 1
      %p196 = por %p194, %p195
      %p197 = scmp.ne.s32.totalorder %s186, %s187
      %p198 = scmp.eq.s32.totalorder %s21, 0
      %p199 = por %p197, %p198
      %p200 = scmp.ne.s32.totalorder %s186, %s187
      %p201 = scmp.eq.s32.totalorder %s22, 1
      %p202 = por %p200, %p201
      %p204 = scmp.ne.s32.totalorder %s187, %s203
      %p205 = scmp.eq.s32.totalorder %s22, 0
      %p206 = por %p204, %p205
      %p207 = scmp.le.s32.totalorder 1, %s16
      %p208 = scmp.lt.s32.totalorder %s16, 3
      %p209 = pnand %p207, %p208
      %p210 = pneg %p209
      // Predicated region
      $region9: #{tpu_custom_call.1} parent=5 // pred_check
        _
      $region10: #{tpu_custom_call.1} parent=5 // pred_check_branch
        %212 = sbr.rel (%p209) target = $region12
      $region11: #{tpu_custom_call.1} parent=5 // pred_region
        %s213 = ssub.s32 %s16, 1
        // Predicated region
        $region13: #{tpu_custom_call.1} parent=11 // pred_check
          %p214 = pneg %p89
        $region14: #{tpu_custom_call.1} parent=11 // pred_check_branch
          %216 = sbr.rel (%p214) target = $region16
        $region15: #{tpu_custom_call.1} parent=11 // pred_region
          _
        $region16: #{tpu_custom_call.1} parent=11 // pred_fallthru
          _
        // Predicated region
        $region17: #{tpu_custom_call.1} parent=11 // pred_check
          %p217 = pneg %p110
        $region18: #{tpu_custom_call.1} parent=11 // pred_check_branch
          %219 = sbr.rel (%p217) target = $region20
        $region19: #{tpu_custom_call.1} parent=11 // pred_region
          _
        $region20: #{tpu_custom_call.1} parent=11 // pred_fallthru
          _
        // Predicated region
        $region21: #{tpu_custom_call.1} parent=11 // pred_check
          %p220 = pneg %p131
        $region22: #{tpu_custom_call.1} parent=11 // pred_check_branch
          %222 = sbr.rel (%p220) target = $region24
        $region23: #{tpu_custom_call.1} parent=11 // pred_region
          _
        $region24: #{tpu_custom_call.1} parent=11 // pred_fallthru
          _
        // Predicated region
        $region25: #{tpu_custom_call.1} parent=11 // pred_check
          %p223 = pneg %p152
        $region26: #{tpu_custom_call.1} parent=11 // pred_check_branch
          %225 = sbr.rel (%p223) target = $region28
        $region27: #{tpu_custom_call.1} parent=11 // pred_region
          _
        $region28: #{tpu_custom_call.1} parent=11 // pred_fallthru
          _
        // Predicated region
        $region29: #{tpu_custom_call.1} parent=11 // pred_check
          %p226 = pneg %p173
        $region30: #{tpu_custom_call.1} parent=11 // pred_check_branch
          %228 = sbr.rel (%p226) target = $region32
        $region31: #{tpu_custom_call.1} parent=11 // pred_region
          _
        $region32: #{tpu_custom_call.1} parent=11 // pred_fallthru
          _
      $region12: #{tpu_custom_call.1} parent=5 // pred_fallthru
        _
      %p229 = scmp.lt.s32.totalorder %s16, 2
      // Predicated region
      $region33: #{tpu_custom_call.1} parent=5 // pred_check
        %p230 = pneg %p229
      $region34: #{tpu_custom_call.1} parent=5 // pred_check_branch
        %232 = sbr.rel (%p230) target = $region36
      $region35: #{tpu_custom_call.1} parent=5 // pred_region
        // Predicated region
        $region37: #{tpu_custom_call.1} parent=35 // pred_check
          %p233 = pneg %p36
        $region38: #{tpu_custom_call.1} parent=35 // pred_check_branch
          %235 = sbr.rel (%p233) target = $region40
        $region39: #{tpu_custom_call.1} parent=35 // pred_region
          %p236 = scmp.lt.s32.totalorder %s16, 1
          %s237 = scalar_select %p236, %s16, 1
          %s238 = smul.addr %s237, 2
          %s239 = smul.addr %s238, 2
          %s240 = scalar_lea.vmem %s0, %s239
        $region40: #{tpu_custom_call.1} parent=35 // pred_fallthru
          _
        // Predicated region
        $region41: #{tpu_custom_call.1} parent=35 // pred_check
          %p241 = pneg %p62
        $region42: #{tpu_custom_call.1} parent=35 // pred_check_branch
          %243 = sbr.rel (%p241) target = $region44
        $region43: #{tpu_custom_call.1} parent=35 // pred_region
          %p244 = scmp.lt.s32.totalorder %s16, 1
          %s245 = scalar_select %p244, %s16, 1
          %s246 = smul.addr %s245, 2
          %s247 = smul.addr %s246, 4
          %s248 = scalar_lea.vmem %s1, %s247
        $region44: #{tpu_custom_call.1} parent=35 // pred_fallthru
          _
      $region36: #{tpu_custom_call.1} parent=5 // pred_fallthru
        _
      %p249 = scmp.le.s32.totalorder 1, %s16
      %p250 = scmp.lt.s32.totalorder %s16, 3
      %p251 = pnand %p249, %p250
      %p252 = pneg %p251
      // Predicated region
      $region45: #{tpu_custom_call.1} parent=5 // pred_check
        _
      $region46: #{tpu_custom_call.1} parent=5 // pred_check_branch
        %254 = sbr.rel (%p251) target = $region48
      $region47: #{tpu_custom_call.1} parent=5 // pred_region
        %s255 = ssub.s32 %s16, 1
        %p256 = scmp.lt.s32.totalorder %s21, 1
        %s257 = scalar_select %p256, %s21, 1
        %s258 = smul.addr %s257, 2
        %s259 = smul.addr %s258, 2
        %s260 = scalar_lea.vmem %s0, %s259
        %p261 = pneg %p42
        %p262 = pneg %p39
        %p263 = scmp.lt.s32.totalorder %s21, 1
        %s264 = scalar_select %p263, %s21, 1
        %s265 = smul.addr %s264, 2
        %s266 = smul.addr %s265, 4
        %s267 = scalar_lea.vmem %s1, %s266
        %p268 = pneg %p68
        %p269 = pneg %p65
        %p270 = pneg %p89
        %p271 = pneg %p86
        %p272 = pneg %p110
        %p273 = pneg %p107
        %p274 = pneg %p131
        %p275 = pneg %p128
        %p276 = pneg %p152
        %p277 = pneg %p149
        %p278 = pneg %p173
        %p279 = pneg %p170
        %p280 = pneg %p199
        %p281 = pneg %p196
        %s282 = sand.u32 %s186, 1
        %s283 = scalar_lea.sflag [#allocation7], %s282
        %s284 = sand.u32 %s186, 1
        %s285 = smul.addr %s284, 8
        %s286 = scalar_lea.vmem [#allocation6], %s285
        %p287 = scmp.lt.s32.totalorder %s21, 1
        %s288 = scalar_select %p287, %s21, 1
        %s289 = smul.addr %s288, 2
        %s290 = smul.addr %s289, 2
        %s291 = scalar_lea.vmem %s0, %s290
        %p292 = scmp.lt.s32.totalorder %s21, 1
        %s293 = scalar_select %p292, %s21, 1
        %s294 = smul.addr %s293, 2
        %s295 = smul.addr %s294, 4
        %s296 = scalar_lea.vmem %s1, %s295
        %v298 = vld [vmem:[%s291] sm:$0xf]
        %v299 = vld [vmem:[%s296] sm:$0x77]
        %v300 = vld [vmem:[%s2] sm:$0xf]
        %v301 = vld [vmem:[%s2 + $0x4] sm:$0xf]
        %v302 = vld [vmem:[%s2 + $0x8] sm:$0xf]
        %v303 = vld [vmem:[%s2 + $0xc] sm:$0xf]
        %v304 = vld [vmem:[%s2 + $0x10] sm:$0xf]
        %v305 = vld [vmem:[%s2 + $0x14] sm:$0xf]
        %v306 = vld [vmem:[%s2 + $0x18] sm:$0xf]
        %v307 = vld [vmem:[%s2 + $0x1c] sm:$0xf]
        %v308 = vld [vmem:[%s2 + $0x20] sm:$0xf]
        %v309 = vld [vmem:[%s2 + $0x24] sm:$0xf]
        %v310 = vld [vmem:[%s2 + $0x28] sm:$0xf]
        %v311 = vld [vmem:[%s2 + $0x2c] sm:$0xf]
        %v312 = vld [vmem:[%s2 + $0x30] sm:$0xf]
        %v313 = vld [vmem:[%s2 + $0x34] sm:$0xf]
        %v314 = vld [vmem:[%s2 + $0x38] sm:$0xf]
        %v315 = vld [vmem:[%s2 + $0x3c] sm:$0xf]
        %v316 = vld [vmem:[%s5] sm:$0xff]
        %v317 = vld [vmem:[%s5 + $0x8] sm:$0xff]
        %v318 = vld [vmem:[%s5 + $0x10] sm:$0xff]
        %v319 = vld [vmem:[%s5 + $0x18] sm:$0xff]
        %v320 = vld [vmem:[%s5 + $0x20] sm:$0xff]
        %v321 = vld [vmem:[%s5 + $0x28] sm:$0xff]
        %v322 = vld [vmem:[%s5 + $0x30] sm:$0xff]
        %v323 = vld [vmem:[%s5 + $0x38] sm:$0xff]
        %v324 = vld [vmem:[%s5 + $0x40] sm:$0xff]
        %v325 = vld [vmem:[%s5 + $0x48] sm:$0xff]
        %v326 = vld [vmem:[%s5 + $0x50] sm:$0xff]
        %v327 = vld [vmem:[%s5 + $0x58] sm:$0xff]
        %v328 = vld [vmem:[%s5 + $0x60] sm:$0xff]
        %v329 = vld [vmem:[%s5 + $0x68] sm:$0xff]
        %v330 = vld [vmem:[%s5 + $0x70] sm:$0xff]
        %v331 = vld [vmem:[%s5 + $0x78] sm:$0xff]
        %333 = vset.pattern.permute.xlu0 0
        %334 = vperm.xlu0 %333, %v316
        %v335 = vpop.permute.xlu0 %334
        %338 = vset.pattern.permute.xlu0 0
        %339 = vperm.xlu0 %338, %v317
        %v340 = vpop.permute.xlu0 %339
        %343 = vset.pattern.permute.xlu0 0
        %344 = vperm.xlu0 %343, %v318
        %v345 = vpop.permute.xlu0 %344
        %348 = vset.pattern.permute.xlu0 0
        %349 = vperm.xlu0 %348, %v319
        %v350 = vpop.permute.xlu0 %349
        %353 = vset.pattern.permute.xlu0 0
        %354 = vperm.xlu0 %353, %v320
        %v355 = vpop.permute.xlu0 %354
        %358 = vset.pattern.permute.xlu0 0
        %359 = vperm.xlu0 %358, %v321
        %v360 = vpop.permute.xlu0 %359
        %363 = vset.pattern.permute.xlu0 0
        %364 = vperm.xlu0 %363, %v322
        %v365 = vpop.permute.xlu0 %364
        %368 = vset.pattern.permute.xlu0 0
        %369 = vperm.xlu0 %368, %v323
        %v370 = vpop.permute.xlu0 %369
        %373 = vset.pattern.permute.xlu0 0
        %374 = vperm.xlu0 %373, %v324
        %v375 = vpop.permute.xlu0 %374
        %378 = vset.pattern.permute.xlu0 0
        %379 = vperm.xlu0 %378, %v325
        %v380 = vpop.permute.xlu0 %379
        %383 = vset.pattern.permute.xlu0 0
        %384 = vperm.xlu0 %383, %v326
        %v385 = vpop.permute.xlu0 %384
        %388 = vset.pattern.permute.xlu0 0
        %389 = vperm.xlu0 %388, %v327
        %v390 = vpop.permute.xlu0 %389
        %393 = vset.pattern.permute.xlu0 0
        %394 = vperm.xlu0 %393, %v328
        %v395 = vpop.permute.xlu0 %394
        %398 = vset.pattern.permute.xlu0 0
        %399 = vperm.xlu0 %398, %v329
        %v400 = vpop.permute.xlu0 %399
        %403 = vset.pattern.permute.xlu0 0
        %404 = vperm.xlu0 %403, %v330
        %v405 = vpop.permute.xlu0 %404
        %408 = vset.pattern.permute.xlu0 0
        %409 = vperm.xlu0 %408, %v331
        %v410 = vpop.permute.xlu0 %409
        %v428 = vunpack.c.l.b16 %v300
        %v429 = vunpack.c.l.b16 %v301
        %v430 = vunpack.c.l.b16 %v302
        %v431 = vunpack.c.l.b16 %v303
        %v432 = vunpack.c.l.b16 %v304
        %v433 = vunpack.c.l.b16 %v305
        %v434 = vunpack.c.l.b16 %v306
        %v435 = vunpack.c.l.b16 %v307
        %v436 = vunpack.c.l.b16 %v308
        %v437 = vunpack.c.l.b16 %v309
        %v438 = vunpack.c.l.b16 %v310
        %v439 = vunpack.c.l.b16 %v311
        %v440 = vunpack.c.l.b16 %v312
        %v441 = vunpack.c.l.b16 %v313
        %v442 = vunpack.c.l.b16 %v314
        %v443 = vunpack.c.l.b16 %v315
        %v444 = vpack.c.b16 %v429, %v428
        %v445 = vpack.c.b16 %v431, %v430
        %v446 = vpack.c.b16 %v433, %v432
        %v447 = vpack.c.b16 %v435, %v434
        %v448 = vpack.c.b16 %v437, %v436
        %v449 = vpack.c.b16 %v439, %v438
        %v450 = vpack.c.b16 %v441, %v440
        %v451 = vpack.c.b16 %v443, %v442
        %v454 = vunpack.c.l.s4 1983009808
        %v455 = vunpack.c.0.s8 %v454
        %v456 = vlaneseq
        %v457 = vshrl.u32 %v456, 7
        %v458 = vsub.s32 %v455, %v457
        %v459 = vrot.slane %v298, %v458
        %v460 = vcombine.high %v459, %v459
        %vm461 = vcmask 31744
        %v463 = vsel %vm461, %v444, 0
        %v466 = vsel %vm461, %v445, 0
        %v469 = vsel %vm461, %v446, 0
        %v472 = vsel %vm461, %v447, 0
        %v475 = vsel %vm461, %v448, 0
        %v478 = vsel %vm461, %v449, 0
        %v481 = vsel %vm461, %v450, 0
        %v484 = vsel %vm461, %v451, 0
        %vm486 = vcmask 1041408
        %v488 = vsel %vm486, %v459, 0
        %v491 = vsel %vm486, %v460, 0
        %493 = vmatprep.subr.bf16.mxu0 %v491
        %494 = vmatpush1.bf16.msra.mxu0 %v488
        %495 = vmatprep.subr.bf16.mxu0 0
        %496 = vmatpush1.bf16.msra.mxu0 0
        %497 = vmatprep.subr.bf16.mxu0 0
        %498 = vmatpush1.bf16.msra.mxu0 0
        %499 = vmatprep.subr.bf16.mxu0 0
        %500 = vmatpush1.bf16.msra.mxu0 0
        %501 = vmatprep.subr.bf16.mxu0 0
        %502 = vmatpush1.bf16.msra.mxu0 0
        %503 = vmatprep.subr.bf16.mxu0 0
        %504 = vmatpush1.bf16.msra.mxu0 0
        %505 = vmatprep.subr.bf16.mxu0 0
        %506 = vmatpush1.bf16.msra.mxu0 0
        %507 = vmatprep.subr.bf16.mxu0 0
        %508 = vmatpush1.bf16.msra.mxu0 0
        %509 = vmatprep.subr.bf16.mxu0 0
        %510 = vmatpush1.bf16.msra.mxu0 0
        %511 = vmatprep.subr.bf16.mxu0 0
        %512 = vmatpush1.bf16.msra.mxu0 0
        %513 = vmatprep.subr.bf16.mxu0 0
        %514 = vmatpush1.bf16.msra.mxu0 0
        %515 = vmatprep.subr.bf16.mxu0 0
        %516 = vmatpush1.bf16.msra.mxu0 0
        %517 = vmatprep.subr.bf16.mxu0 0
        %518 = vmatpush1.bf16.msra.mxu0 0
        %519 = vmatprep.subr.bf16.mxu0 0
        %520 = vmatpush1.bf16.msra.mxu0 0
        %521 = vmatprep.subr.bf16.mxu0 0
        %522 = vmatpush1.bf16.msra.mxu0 0
        %523 = vmatprep.subr.bf16.mxu0 0
        %524 = vmatpush1.bf16.msra.mxu0 0
        %525 = vmatprep.mubr.bf16.mxu0 0
        %526 = vmatmul.mubr.bf16.gmra.mrb[0].mxu0 %v463
        %v527 = vpop.f32.mrb[0].mxu0
        %v528 = vadd.f32 %v335, %v527
        %v529 = vpop.f32.mrb[0].mxu0
        %v530 = vadd.f32 %v335, %v529
        %v531 = vpop.f32.mrb[0].mxu0
        %v532 = vadd.f32 %v340, %v531
        %v533 = vpop.f32.mrb[0].mxu0
        %v534 = vadd.f32 %v340, %v533
        %535 = vmatprep.mubr.bf16.mxu0 0
        %536 = vmatmul.mubr.bf16.gmra.mrb[0].mxu0 %v466
        %v537 = vpop.f32.mrb[0].mxu0
        %v538 = vadd.f32 %v345, %v537
        %v539 = vpop.f32.mrb[0].mxu0
        %v540 = vadd.f32 %v345, %v539
        %v541 = vpop.f32.mrb[0].mxu0
        %v542 = vadd.f32 %v350, %v541
        %v543 = vpop.f32.mrb[0].mxu0
        %v544 = vadd.f32 %v350, %v543
        %545 = vmatprep.mubr.bf16.mxu0 0
        %546 = vmatmul.mubr.bf16.gmra.mrb[0].mxu0 %v469
        %v547 = vpop.f32.mrb[0].mxu0
        %v548 = vadd.f32 %v355, %v547
        %v549 = vpop.f32.mrb[0].mxu0
        %v550 = vadd.f32 %v355, %v549
        %v551 = vpop.f32.mrb[0].mxu0
        %v552 = vadd.f32 %v360, %v551
        %v553 = vpop.f32.mrb[0].mxu0
        %v554 = vadd.f32 %v360, %v553
        %555 = vmatprep.mubr.bf16.mxu0 0
        %556 = vmatmul.mubr.bf16.gmra.mrb[0].mxu0 %v472
        %v557 = vpop.f32.mrb[0].mxu0
        %v558 = vadd.f32 %v365, %v557
        %v559 = vpop.f32.mrb[0].mxu0
        %v560 = vadd.f32 %v365, %v559
        %v561 = vpop.f32.mrb[0].mxu0
        %v562 = vadd.f32 %v370, %v561
        %v563 = vpop.f32.mrb[0].mxu0
        %v564 = vadd.f32 %v370, %v563
        %565 = vmatprep.mubr.bf16.mxu0 0
        %566 = vmatmul.mubr.bf16.gmra.mrb[0].mxu0 %v475
        %v567 = vpop.f32.mrb[0].mxu0
        %v568 = vadd.f32 %v375, %v567
        %v569 = vpop.f32.mrb[0].mxu0
        %v570 = vadd.f32 %v375, %v569
        %v571 = vpop.f32.mrb[0].mxu0
        %v572 = vadd.f32 %v380, %v571
        %v573 = vpop.f32.mrb[0].mxu0
        %v574 = vadd.f32 %v380, %v573
        %575 = vmatprep.mubr.bf16.mxu0 0
        %576 = vmatmul.mubr.bf16.gmra.mrb[0].mxu0 %v478
        %v577 = vpop.f32.mrb[0].mxu0
        %v578 = vadd.f32 %v385, %v577
        %v579 = vpop.f32.mrb[0].mxu0
        %v580 = vadd.f32 %v385, %v579
        %v581 = vpop.f32.mrb[0].mxu0
        %v582 = vadd.f32 %v390, %v581
        %v583 = vpop.f32.mrb[0].mxu0
        %v584 = vadd.f32 %v390, %v583
        %585 = vmatprep.mubr.bf16.mxu0 0
        %586 = vmatmul.mubr.bf16.gmra.mrb[0].mxu0 %v481
        %v587 = vpop.f32.mrb[0].mxu0
        %v588 = vadd.f32 %v395, %v587
        %v589 = vpop.f32.mrb[0].mxu0
        %v590 = vadd.f32 %v395, %v589
        %v591 = vpop.f32.mrb[0].mxu0
        %v592 = vadd.f32 %v400, %v591
        %v593 = vpop.f32.mrb[0].mxu0
        %v594 = vadd.f32 %v400, %v593
        %595 = vmatprep.mubr.bf16.mxu0 0
        %596 = vmatmul.mubr.bf16.gmra.mrb[0].mxu0 %v484
        %v597 = vpop.f32.mrb[0].mxu0
        %v598 = vadd.f32 %v405, %v597
        %v599 = vpop.f32.mrb[0].mxu0
        %v600 = vadd.f32 %v405, %v599
        %v601 = vpop.f32.mrb[0].mxu0
        %v602 = vadd.f32 %v410, %v601
        %v603 = vpop.f32.mrb[0].mxu0
        %v604 = vadd.f32 %v410, %v603
        %605 = vdwg.mxu0
        %v606 = vmul.f32 %v528, 0.17677669
        %v607 = vmul.f32 %v530, 0.17677669
        %v608 = vmul.f32 %v532, 0.17677669
        %v609 = vmul.f32 %v534, 0.17677669
        %v610 = vmul.f32 %v538, 0.17677669
        %v611 = vmul.f32 %v540, 0.17677669
        %v612 = vmul.f32 %v542, 0.17677669
        %v613 = vmul.f32 %v544, 0.17677669
        %v614 = vmul.f32 %v548, 0.17677669
        %v615 = vmul.f32 %v550, 0.17677669
        %v616 = vmul.f32 %v552, 0.17677669
        %v617 = vmul.f32 %v554, 0.17677669
        %v618 = vmul.f32 %v558, 0.17677669
        %v619 = vmul.f32 %v560, 0.17677669
        %v620 = vmul.f32 %v562, 0.17677669
        %v621 = vmul.f32 %v564, 0.17677669
        %v622 = vmul.f32 %v568, 0.17677669
        %v623 = vmul.f32 %v570, 0.17677669
        %v624 = vmul.f32 %v572, 0.17677669
        %v625 = vmul.f32 %v574, 0.17677669
        %v626 = vmul.f32 %v578, 0.17677669
        %v627 = vmul.f32 %v580, 0.17677669
        %v628 = vmul.f32 %v582, 0.17677669
        %v629 = vmul.f32 %v584, 0.17677669
        %v630 = vmul.f32 %v588, 0.17677669
        %v631 = vmul.f32 %v590, 0.17677669
        %v632 = vmul.f32 %v592, 0.17677669
        %v633 = vmul.f32 %v594, 0.17677669
        %v634 = vmul.f32 %v598, 0.17677669
        %v635 = vmul.f32 %v600, 0.17677669
        %v636 = vmul.f32 %v602, 0.17677669
        %v637 = vmul.f32 %v604, 0.17677669
        %v638 = vpack.c.bf16 %v608, %v606
        %v639 = vpack.c.bf16 %v609, %v607
        %v640 = vpack.c.bf16 %v612, %v610
        %v641 = vpack.c.bf16 %v613, %v611
        %v642 = vpack.c.bf16 %v616, %v614
        %v643 = vpack.c.bf16 %v617, %v615
        %v644 = vpack.c.bf16 %v620, %v618
        %v645 = vpack.c.bf16 %v621, %v619
        %v646 = vpack.c.bf16 %v624, %v622
        %v647 = vpack.c.bf16 %v625, %v623
        %v648 = vpack.c.bf16 %v628, %v626
        %v649 = vpack.c.bf16 %v629, %v627
        %v650 = vpack.c.bf16 %v632, %v630
        %v651 = vpack.c.bf16 %v633, %v631
        %v652 = vpack.c.bf16 %v636, %v634
        %v653 = vpack.c.bf16 %v637, %v635
        %654 = vst [vmem:[#allocation2] sm:$0xff] %v638
        %655 = vst [vmem:[#allocation2 + $0x8] sm:$0xff] %v639
        %656 = vst [vmem:[#allocation2 + $0x10] sm:$0xff] %v640
        %657 = vst [vmem:[#allocation2 + $0x18] sm:$0xff] %v641
        %658 = vst [vmem:[#allocation2 + $0x20] sm:$0xff] %v642
        %659 = vst [vmem:[#allocation2 + $0x28] sm:$0xff] %v643
        %660 = vst [vmem:[#allocation2 + $0x30] sm:$0xff] %v644
        %661 = vst [vmem:[#allocation2 + $0x38] sm:$0xff] %v645
        %662 = vst [vmem:[#allocation2 + $0x40] sm:$0xff] %v646
        %663 = vst [vmem:[#allocation2 + $0x48] sm:$0xff] %v647
        %664 = vst [vmem:[#allocation2 + $0x50] sm:$0xff] %v648
        %665 = vst [vmem:[#allocation2 + $0x58] sm:$0xff] %v649
        %666 = vst [vmem:[#allocation2 + $0x60] sm:$0xff] %v650
        %667 = vst [vmem:[#allocation2 + $0x68] sm:$0xff] %v651
        %668 = vst [vmem:[#allocation2 + $0x70] sm:$0xff] %v652
        %669 = vst [vmem:[#allocation2 + $0x78] sm:$0xff] %v653
        %v670 = vld [vmem:[%s3] sm:$0xf]
        %v671 = vld [vmem:[%s3 + $0x4] sm:$0xf]
        %v672 = vld [vmem:[%s3 + $0x8] sm:$0xf]
        %v673 = vld [vmem:[%s3 + $0xc] sm:$0xf]
        %v674 = vld [vmem:[%s3 + $0x10] sm:$0xf]
        %v675 = vld [vmem:[%s3 + $0x14] sm:$0xf]
        %v676 = vld [vmem:[%s3 + $0x18] sm:$0xf]
        %v677 = vld [vmem:[%s3 + $0x1c] sm:$0xf]
        %v678 = vld [vmem:[%s3 + $0x20] sm:$0xf]
        %v679 = vld [vmem:[%s3 + $0x24] sm:$0xf]
        %v680 = vld [vmem:[%s3 + $0x28] sm:$0xf]
        %v681 = vld [vmem:[%s3 + $0x2c] sm:$0xf]
        %v682 = vld [vmem:[%s3 + $0x30] sm:$0xf]
        %v683 = vld [vmem:[%s3 + $0x34] sm:$0xf]
        %v684 = vld [vmem:[%s3 + $0x38] sm:$0xf]
        %v685 = vld [vmem:[%s3 + $0x3c] sm:$0xf]
        %v686 = vld [vmem:[%s3 + $0x40] sm:$0xf]
        %v687 = vld [vmem:[%s3 + $0x44] sm:$0xf]
        %v688 = vld [vmem:[%s3 + $0x48] sm:$0xf]
        %v689 = vld [vmem:[%s3 + $0x4c] sm:$0xf]
        %v690 = vld [vmem:[%s3 + $0x50] sm:$0xf]
        %v691 = vld [vmem:[%s3 + $0x54] sm:$0xf]
        %v692 = vld [vmem:[%s3 + $0x58] sm:$0xf]
        %v693 = vld [vmem:[%s3 + $0x5c] sm:$0xf]
        %v694 = vld [vmem:[%s3 + $0x60] sm:$0xf]
        %v695 = vld [vmem:[%s3 + $0x64] sm:$0xf]
        %v696 = vld [vmem:[%s3 + $0x68] sm:$0xf]
        %v697 = vld [vmem:[%s3 + $0x6c] sm:$0xf]
        %v698 = vld [vmem:[%s3 + $0x70] sm:$0xf]
        %v699 = vld [vmem:[%s3 + $0x74] sm:$0xf]
        %v700 = vld [vmem:[%s3 + $0x78] sm:$0xf]
        %v701 = vld [vmem:[%s3 + $0x7c] sm:$0xf]
        %v702 = vld [vmem:[%s6] sm:$0xff]
        %v703 = vld [vmem:[%s6 + $0x8] sm:$0xff]
        %v704 = vld [vmem:[%s6 + $0x10] sm:$0xff]
        %v705 = vld [vmem:[%s6 + $0x18] sm:$0xff]
        %v706 = vld [vmem:[%s6 + $0x20] sm:$0xff]
        %v707 = vld [vmem:[%s6 + $0x28] sm:$0xff]
        %v708 = vld [vmem:[%s6 + $0x30] sm:$0xff]
        %v709 = vld [vmem:[%s6 + $0x38] sm:$0xff]
        %v710 = vld [vmem:[%s6 + $0x40] sm:$0xff]
        %v711 = vld [vmem:[%s6 + $0x48] sm:$0xff]
        %v712 = vld [vmem:[%s6 + $0x50] sm:$0xff]
        %v713 = vld [vmem:[%s6 + $0x58] sm:$0xff]
        %v714 = vld [vmem:[%s6 + $0x60] sm:$0xff]
        %v715 = vld [vmem:[%s6 + $0x68] sm:$0xff]
        %v716 = vld [vmem:[%s6 + $0x70] sm:$0xff]
        %v717 = vld [vmem:[%s6 + $0x78] sm:$0xff]
        %v718 = vld [vmem:[%s6 + $0x80] sm:$0xff]
        %v719 = vld [vmem:[%s6 + $0x88] sm:$0xff]
        %v720 = vld [vmem:[%s6 + $0x90] sm:$0xff]
        %v721 = vld [vmem:[%s6 + $0x98] sm:$0xff]
        %v722 = vld [vmem:[%s6 + $0xa0] sm:$0xff]
        %v723 = vld [vmem:[%s6 + $0xa8] sm:$0xff]
        %v724 = vld [vmem:[%s6 + $0xb0] sm:$0xff]
        %v725 = vld [vmem:[%s6 + $0xb8] sm:$0xff]
        %v726 = vld [vmem:[%s6 + $0xc0] sm:$0xff]
        %v727 = vld [vmem:[%s6 + $0xc8] sm:$0xff]
        %v728 = vld [vmem:[%s6 + $0xd0] sm:$0xff]
        %v729 = vld [vmem:[%s6 + $0xd8] sm:$0xff]
        %v730 = vld [vmem:[%s6 + $0xe0] sm:$0xff]
        %v731 = vld [vmem:[%s6 + $0xe8] sm:$0xff]
        %v732 = vld [vmem:[%s6 + $0xf0] sm:$0xff]
        %v733 = vld [vmem:[%s6 + $0xf8] sm:$0xff]
        %735 = vset.pattern.permute.xlu0 0
        %736 = vperm.xlu0 %735, %v702
        %v737 = vpop.permute.xlu0 %736
        %740 = vset.pattern.permute.xlu0 0
        %741 = vperm.xlu0 %740, %v703
        %v742 = vpop.permute.xlu0 %741
        %745 = vset.pattern.permute.xlu0 0
        %746 = vperm.xlu0 %745, %v704
        %v747 = vpop.permute.xlu0 %746
        %750 = vset.pattern.permute.xlu0 0
        %751 = vperm.xlu0 %750, %v705
        %v752 = vpop.permute.xlu0 %751
        %755 = vset.pattern.permute.xlu0 0
        %756 = vperm.xlu0 %755, %v706
        %v757 = vpop.permute.xlu0 %756
        %760 = vset.pattern.permute.xlu0 0
        %761 = vperm.xlu0 %760, %v707
        %v762 = vpop.permute.xlu0 %761
        %765 = vset.pattern.permute.xlu0 0
        %766 = vperm.xlu0 %765, %v708
        %v767 = vpop.permute.xlu0 %766
        %770 = vset.pattern.permute.xlu0 0
        %771 = vperm.xlu0 %770, %v709
        %v772 = vpop.permute.xlu0 %771
        %775 = vset.pattern.permute.xlu0 0
        %776 = vperm.xlu0 %775, %v710
        %v777 = vpop.permute.xlu0 %776
        %780 = vset.pattern.permute.xlu0 0
        %781 = vperm.xlu0 %780, %v711
        %v782 = vpop.permute.xlu0 %781
        %785 = vset.pattern.permute.xlu0 0
        %786 = vperm.xlu0 %785, %v712
        %v787 = vpop.permute.xlu0 %786
        %790 = vset.pattern.permute.xlu0 0
        %791 = vperm.xlu0 %790, %v713
        %v792 = vpop.permute.xlu0 %791
        %795 = vset.pattern.permute.xlu0 0
        %796 = vperm.xlu0 %795, %v714
        %v797 = vpop.permute.xlu0 %796
        %800 = vset.pattern.permute.xlu0 0
        %801 = vperm.xlu0 %800, %v715
        %v802 = vpop.permute.xlu0 %801
        %805 = vset.pattern.permute.xlu0 0
        %806 = vperm.xlu0 %805, %v716
        %v807 = vpop.permute.xlu0 %806
        %810 = vset.pattern.permute.xlu0 0
        %811 = vperm.xlu0 %810, %v717
        %v812 = vpop.permute.xlu0 %811
        %815 = vset.pattern.permute.xlu0 0
        %816 = vperm.xlu0 %815, %v718
        %v817 = vpop.permute.xlu0 %816
        %820 = vset.pattern.permute.xlu0 0
        %821 = vperm.xlu0 %820, %v719
        %v822 = vpop.permute.xlu0 %821
        %825 = vset.pattern.permute.xlu0 0
        %826 = vperm.xlu0 %825, %v720
        %v827 = vpop.permute.xlu0 %826
        %830 = vset.pattern.permute.xlu0 0
        %831 = vperm.xlu0 %830, %v721
        %v832 = vpop.permute.xlu0 %831
        %835 = vset.pattern.permute.xlu0 0
        %836 = vperm.xlu0 %835, %v722
        %v837 = vpop.permute.xlu0 %836
        %840 = vset.pattern.permute.xlu0 0
        %841 = vperm.xlu0 %840, %v723
        %v842 = vpop.permute.xlu0 %841
        %845 = vset.pattern.permute.xlu0 0
        %846 = vperm.xlu0 %845, %v724
        %v847 = vpop.permute.xlu0 %846
        %850 = vset.pattern.permute.xlu0 0
        %851 = vperm.xlu0 %850, %v725
        %v852 = vpop.permute.xlu0 %851
        %855 = vset.pattern.permute.xlu0 0
        %856 = vperm.xlu0 %855, %v726
        %v857 = vpop.permute.xlu0 %856
        %860 = vset.pattern.permute.xlu0 0
        %861 = vperm.xlu0 %860, %v727
        %v862 = vpop.permute.xlu0 %861
        %865 = vset.pattern.permute.xlu0 0
        %866 = vperm.xlu0 %865, %v728
        %v867 = vpop.permute.xlu0 %866
        %870 = vset.pattern.permute.xlu0 0
        %871 = vperm.xlu0 %870, %v729
        %v872 = vpop.permute.xlu0 %871
        %875 = vset.pattern.permute.xlu0 0
        %876 = vperm.xlu0 %875, %v730
        %v877 = vpop.permute.xlu0 %876
        %880 = vset.pattern.permute.xlu0 0
        %881 = vperm.xlu0 %880, %v731
        %v882 = vpop.permute.xlu0 %881
        %885 = vset.pattern.permute.xlu0 0
        %886 = vperm.xlu0 %885, %v732
        %v887 = vpop.permute.xlu0 %886
        %890 = vset.pattern.permute.xlu0 0
        %891 = vperm.xlu0 %890, %v733
        %v892 = vpop.permute.xlu0 %891
        %v926 = vunpack.c.l.b16 %v670
        %v927 = vunpack.c.l.b16 %v671
        %v928 = vunpack.c.l.b16 %v672
        %v929 = vunpack.c.l.b16 %v673
        %v930 = vunpack.c.l.b16 %v674
        %v931 = vunpack.c.l.b16 %v675
        %v932 = vunpack.c.l.b16 %v676
        %v933 = vunpack.c.l.b16 %v677
        %v934 = vunpack.c.l.b16 %v678
        %v935 = vunpack.c.l.b16 %v679
        %v936 = vunpack.c.l.b16 %v680
        %v937 = vunpack.c.l.b16 %v681
        %v938 = vunpack.c.l.b16 %v682
        %v939 = vunpack.c.l.b16 %v683
        %v940 = vunpack.c.l.b16 %v684
        %v941 = vunpack.c.l.b16 %v685
        %v942 = vunpack.c.l.b16 %v686
        %v943 = vunpack.c.l.b16 %v687
        %v944 = vunpack.c.l.b16 %v688
        %v945 = vunpack.c.l.b16 %v689
        %v946 = vunpack.c.l.b16 %v690
        %v947 = vunpack.c.l.b16 %v691
        %v948 = vunpack.c.l.b16 %v692
        %v949 = vunpack.c.l.b16 %v693
        %v950 = vunpack.c.l.b16 %v694
        %v951 = vunpack.c.l.b16 %v695
        %v952 = vunpack.c.l.b16 %v696
        %v953 = vunpack.c.l.b16 %v697
        %v954 = vunpack.c.l.b16 %v698
        %v955 = vunpack.c.l.b16 %v699
        %v956 = vunpack.c.l.b16 %v700
        %v957 = vunpack.c.l.b16 %v701
        %v958 = vpack.c.b16 %v927, %v926
        %v959 = vpack.c.b16 %v929, %v928
        %v960 = vpack.c.b16 %v931, %v930
        %v961 = vpack.c.b16 %v933, %v932
        %v962 = vpack.c.b16 %v935, %v934
        %v963 = vpack.c.b16 %v937, %v936
        %v964 = vpack.c.b16 %v939, %v938
        %v965 = vpack.c.b16 %v941, %v940
        %v966 = vpack.c.b16 %v943, %v942
        %v967 = vpack.c.b16 %v945, %v944
        %v968 = vpack.c.b16 %v947, %v946
        %v969 = vpack.c.b16 %v949, %v948
        %v970 = vpack.c.b16 %v951, %v950
        %v971 = vpack.c.b16 %v953, %v952
        %v972 = vpack.c.b16 %v955, %v954
        %v973 = vpack.c.b16 %v957, %v956
        %v975 = vunpack.c.l.b16 %v299
        %v976 = vunpack.c.h.b16 %v299
        %v977 = vpack.c.b16 %v975, %v975
        %v978 = vpack.c.b16 %v976, %v976
        %vm979 = vcmask 48128
        %v981 = vsel %vm979, %v958, 0
        %v984 = vsel %vm979, %v959, 0
        %v987 = vsel %vm979, %v960, 0
        %v990 = vsel %vm979, %v961, 0
        %v993 = vsel %vm979, %v962, 0
        %v996 = vsel %vm979, %v963, 0
        %v999 = vsel %vm979, %v964, 0
        %v1002 = vsel %vm979, %v965, 0
        %v1005 = vsel %vm979, %v966, 0
        %v1008 = vsel %vm979, %v967, 0
        %v1011 = vsel %vm979, %v968, 0
        %v1014 = vsel %vm979, %v969, 0
        %v1017 = vsel %vm979, %v970, 0
        %v1020 = vsel %vm979, %v971, 0
        %v1023 = vsel %vm979, %v972, 0
        %v1026 = vsel %vm979, %v973, 0
        %vm1028 = vcmask 1042432
        %v1030 = vsel %vm1028, %v977, 0
        %v1033 = vsel %vm1028, %v978, 0
        %1035 = vmatprep.subr.bf16.mxu0 %v1033
        %1036 = vmatpush1.bf16.msra.mxu0 %v1030
        %1037 = vmatprep.subr.bf16.mxu0 0
        %1038 = vmatpush1.bf16.msra.mxu0 0
        %1039 = vmatprep.subr.bf16.mxu0 0
        %1040 = vmatpush1.bf16.msra.mxu0 0
        %1041 = vmatprep.subr.bf16.mxu0 0
        %1042 = vmatpush1.bf16.msra.mxu0 0
        %1043 = vmatprep.subr.bf16.mxu0 0
        %1044 = vmatpush1.bf16.msra.mxu0 0
        %1045 = vmatprep.subr.bf16.mxu0 0
        %1046 = vmatpush1.bf16.msra.mxu0 0
        %1047 = vmatprep.subr.bf16.mxu0 0
        %1048 = vmatpush1.bf16.msra.mxu0 0
        %1049 = vmatprep.subr.bf16.mxu0 0
        %1050 = vmatpush1.bf16.msra.mxu0 0
        %1051 = vmatprep.subr.bf16.mxu0 0
        %1052 = vmatpush1.bf16.msra.mxu0 0
        %1053 = vmatprep.subr.bf16.mxu0 0
        %1054 = vmatpush1.bf16.msra.mxu0 0
        %1055 = vmatprep.subr.bf16.mxu0 0
        %1056 = vmatpush1.bf16.msra.mxu0 0
        %1057 = vmatprep.subr.bf16.mxu0 0
        %1058 = vmatpush1.bf16.msra.mxu0 0
        %1059 = vmatprep.subr.bf16.mxu0 0
        %1060 = vmatpush1.bf16.msra.mxu0 0
        %1061 = vmatprep.subr.bf16.mxu0 0
        %1062 = vmatpush1.bf16.msra.mxu0 0
        %1063 = vmatprep.subr.bf16.mxu0 0
        %1064 = vmatpush1.bf16.msra.mxu0 0
        %1065 = vmatprep.subr.bf16.mxu0 0
        %1066 = vmatpush1.bf16.msra.mxu0 0
        %1067 = vmatprep.mubr.bf16.mxu0 0
        %1068 = vmatmul.mubr.bf16.gmra.mrb[0].mxu0 %v981
        %v1069 = vpop.f32.mrb[0].mxu0
        %v1070 = vadd.f32 %v737, %v1069
        %v1071 = vpop.f32.mrb[0].mxu0
        %v1072 = vadd.f32 %v737, %v1071
        %v1073 = vpop.f32.mrb[0].mxu0
        %v1074 = vadd.f32 %v742, %v1073
        %v1075 = vpop.f32.mrb[0].mxu0
        %v1076 = vadd.f32 %v742, %v1075
        %1077 = vmatprep.mubr.bf16.mxu0 0
        %1078 = vmatmul.mubr.bf16.gmra.mrb[0].mxu0 %v984
        %v1079 = vpop.f32.mrb[0].mxu0
        %v1080 = vadd.f32 %v747, %v1079
        %v1081 = vpop.f32.mrb[0].mxu0
        %v1082 = vadd.f32 %v747, %v1081
        %v1083 = vpop.f32.mrb[0].mxu0
        %v1084 = vadd.f32 %v752, %v1083
        %v1085 = vpop.f32.mrb[0].mxu0
        %v1086 = vadd.f32 %v752, %v1085
        %1087 = vmatprep.mubr.bf16.mxu0 0
        %1088 = vmatmul.mubr.bf16.gmra.mrb[0].mxu0 %v987
        %v1089 = vpop.f32.mrb[0].mxu0
        %v1090 = vadd.f32 %v757, %v1089
        %v1091 = vpop.f32.mrb[0].mxu0
        %v1092 = vadd.f32 %v757, %v1091
        %v1093 = vpop.f32.mrb[0].mxu0
        %v1094 = vadd.f32 %v762, %v1093
        %v1095 = vpop.f32.mrb[0].mxu0
        %v1096 = vadd.f32 %v762, %v1095
        %1097 = vmatprep.mubr.bf16.mxu0 0
        %1098 = vmatmul.mubr.bf16.gmra.mrb[0].mxu0 %v990
        %v1099 = vpop.f32.mrb[0].mxu0
        %v1100 = vadd.f32 %v767, %v1099
        %v1101 = vpop.f32.mrb[0].mxu0
        %v1102 = vadd.f32 %v767, %v1101
        %v1103 = vpop.f32.mrb[0].mxu0
        %v1104 = vadd.f32 %v772, %v1103
        %v1105 = vpop.f32.mrb[0].mxu0
        %v1106 = vadd.f32 %v772, %v1105
        %1107 = vmatprep.mubr.bf16.mxu0 0
        %1108 = vmatmul.mubr.bf16.gmra.mrb[0].mxu0 %v993
        %v1109 = vpop.f32.mrb[0].mxu0
        %v1110 = vadd.f32 %v777, %v1109
        %v1111 = vpop.f32.mrb[0].mxu0
        %v1112 = vadd.f32 %v777, %v1111
        %v1113 = vpop.f32.mrb[0].mxu0
        %v1114 = vadd.f32 %v782, %v1113
        %v1115 = vpop.f32.mrb[0].mxu0
        %v1116 = vadd.f32 %v782, %v1115
        %1117 = vmatprep.mubr.bf16.mxu0 0
        %1118 = vmatmul.mubr.bf16.gmra.mrb[0].mxu0 %v996
        %v1119 = vpop.f32.mrb[0].mxu0
        %v1120 = vadd.f32 %v787, %v1119
        %v1121 = vpop.f32.mrb[0].mxu0
        %v1122 = vadd.f32 %v787, %v1121
        %v1123 = vpop.f32.mrb[0].mxu0
        %v1124 = vadd.f32 %v792, %v1123
        %v1125 = vpop.f32.mrb[0].mxu0
        %v1126 = vadd.f32 %v792, %v1125
        %1127 = vmatprep.mubr.bf16.mxu0 0
        %1128 = vmatmul.mubr.bf16.gmra.mrb[0].mxu0 %v999
        %v1129 = vpop.f32.mrb[0].mxu0
        %v1130 = vadd.f32 %v797, %v1129
        %v1131 = vpop.f32.mrb[0].mxu0
        %v1132 = vadd.f32 %v797, %v1131
        %v1133 = vpop.f32.mrb[0].mxu0
        %v1134 = vadd.f32 %v802, %v1133
        %v1135 = vpop.f32.mrb[0].mxu0
        %v1136 = vadd.f32 %v802, %v1135
        %1137 = vmatprep.mubr.bf16.mxu0 0
        %1138 = vmatmul.mubr.bf16.gmra.mrb[0].mxu0 %v1002
        %v1139 = vpop.f32.mrb[0].mxu0
        %v1140 = vadd.f32 %v807, %v1139
        %v1141 = vpop.f32.mrb[0].mxu0
        %v1142 = vadd.f32 %v807, %v1141
        %v1143 = vpop.f32.mrb[0].mxu0
        %v1144 = vadd.f32 %v812, %v1143
        %v1145 = vpop.f32.mrb[0].mxu0
        %v1146 = vadd.f32 %v812, %v1145
        %1147 = vmatprep.mubr.bf16.mxu0 0
        %1148 = vmatmul.mubr.bf16.gmra.mrb[0].mxu0 %v1005
        %v1149 = vpop.f32.mrb[0].mxu0
        %v1150 = vadd.f32 %v817, %v1149
        %v1151 = vpop.f32.mrb[0].mxu0
        %v1152 = vadd.f32 %v817, %v1151
        %v1153 = vpop.f32.mrb[0].mxu0
        %v1154 = vadd.f32 %v822, %v1153
        %v1155 = vpop.f32.mrb[0].mxu0
        %v1156 = vadd.f32 %v822, %v1155
        %1157 = vmatprep.mubr.bf16.mxu0 0
        %1158 = vmatmul.mubr.bf16.gmra.mrb[0].mxu0 %v1008
        %v1159 = vpop.f32.mrb[0].mxu0
        %v1160 = vadd.f32 %v827, %v1159
        %v1161 = vpop.f32.mrb[0].mxu0
        %v1162 = vadd.f32 %v827, %v1161
        %v1163 = vpop.f32.mrb[0].mxu0
        %v1164 = vadd.f32 %v832, %v1163
        %v1165 = vpop.f32.mrb[0].mxu0
        %v1166 = vadd.f32 %v832, %v1165
        %1167 = vmatprep.mubr.bf16.mxu0 0
        %1168 = vmatmul.mubr.bf16.gmra.mrb[0].mxu0 %v1011
        %v1169 = vpop.f32.mrb[0].mxu0
        %v1170 = vadd.f32 %v837, %v1169
        %v1171 = vpop.f32.mrb[0].mxu0
        %v1172 = vadd.f32 %v837, %v1171
        %v1173 = vpop.f32.mrb[0].mxu0
        %v1174 = vadd.f32 %v842, %v1173
        %v1175 = vpop.f32.mrb[0].mxu0
        %v1176 = vadd.f32 %v842, %v1175
        %1177 = vmatprep.mubr.bf16.mxu0 0
        %1178 = vmatmul.mubr.bf16.gmra.mrb[0].mxu0 %v1014
        %v1179 = vpop.f32.mrb[0].mxu0
        %v1180 = vadd.f32 %v847, %v1179
        %v1181 = vpop.f32.mrb[0].mxu0
        %v1182 = vadd.f32 %v847, %v1181
        %v1183 = vpop.f32.mrb[0].mxu0
        %v1184 = vadd.f32 %v852, %v1183
        %v1185 = vpop.f32.mrb[0].mxu0
        %v1186 = vadd.f32 %v852, %v1185
        %1187 = vmatprep.mubr.bf16.mxu0 0
        %1188 = vmatmul.mubr.bf16.gmra.mrb[0].mxu0 %v1017
        %v1189 = vpop.f32.mrb[0].mxu0
        %v1190 = vadd.f32 %v857, %v1189
        %v1191 = vpop.f32.mrb[0].mxu0
        %v1192 = vadd.f32 %v857, %v1191
        %v1193 = vpop.f32.mrb[0].mxu0
        %v1194 = vadd.f32 %v862, %v1193
        %v1195 = vpop.f32.mrb[0].mxu0
        %v1196 = vadd.f32 %v862, %v1195
        %1197 = vmatprep.mubr.bf16.mxu0 0
        %1198 = vmatmul.mubr.bf16.gmra.mrb[0].mxu0 %v1020
        %v1199 = vpop.f32.mrb[0].mxu0
        %v1200 = vadd.f32 %v867, %v1199
        %v1201 = vpop.f32.mrb[0].mxu0
        %v1202 = vadd.f32 %v867, %v1201
        %v1203 = vpop.f32.mrb[0].mxu0
        %v1204 = vadd.f32 %v872, %v1203
        %v1205 = vpop.f32.mrb[0].mxu0
        %v1206 = vadd.f32 %v872, %v1205
        %1207 = vmatprep.mubr.bf16.mxu0 0
        %1208 = vmatmul.mubr.bf16.gmra.mrb[0].mxu0 %v1023
        %v1209 = vpop.f32.mrb[0].mxu0
        %v1210 = vadd.f32 %v877, %v1209
        %v1211 = vpop.f32.mrb[0].mxu0
        %v1212 = vadd.f32 %v877, %v1211
        %v1213 = vpop.f32.mrb[0].mxu0
        %v1214 = vadd.f32 %v882, %v1213
        %v1215 = vpop.f32.mrb[0].mxu0
        %v1216 = vadd.f32 %v882, %v1215
        %1217 = vmatprep.mubr.bf16.mxu0 0
        %1218 = vmatmul.mubr.bf16.gmra.mrb[0].mxu0 %v1026
        %v1219 = vpop.f32.mrb[0].mxu0
        %v1220 = vadd.f32 %v887, %v1219
        %v1221 = vpop.f32.mrb[0].mxu0
        %v1222 = vadd.f32 %v887, %v1221
        %v1223 = vpop.f32.mrb[0].mxu0
        %v1224 = vadd.f32 %v892, %v1223
        %v1225 = vpop.f32.mrb[0].mxu0
        %v1226 = vadd.f32 %v892, %v1225
        %1227 = vdwg.mxu0
        %v1228 = vpack.c.bf16 %v1074, %v1070
        %v1229 = vpack.c.bf16 %v1076, %v1072
        %v1230 = vpack.c.bf16 %v1084, %v1080
        %v1231 = vpack.c.bf16 %v1086, %v1082
        %v1232 = vpack.c.bf16 %v1094, %v1090
        %v1233 = vpack.c.bf16 %v1096, %v1092
        %v1234 = vpack.c.bf16 %v1104, %v1100
        %v1235 = vpack.c.bf16 %v1106, %v1102
        %v1236 = vpack.c.bf16 %v1114, %v1110
        %v1237 = vpack.c.bf16 %v1116, %v1112
        %v1238 = vpack.c.bf16 %v1124, %v1120
        %v1239 = vpack.c.bf16 %v1126, %v1122
        %v1240 = vpack.c.bf16 %v1134, %v1130
        %v1241 = vpack.c.bf16 %v1136, %v1132
        %v1242 = vpack.c.bf16 %v1144, %v1140
        %v1243 = vpack.c.bf16 %v1146, %v1142
        %v1244 = vpack.c.bf16 %v1154, %v1150
        %v1245 = vpack.c.bf16 %v1156, %v1152
        %v1246 = vpack.c.bf16 %v1164, %v1160
        %v1247 = vpack.c.bf16 %v1166, %v1162
        %v1248 = vpack.c.bf16 %v1174, %v1170
        %v1249 = vpack.c.bf16 %v1176, %v1172
        %v1250 = vpack.c.bf16 %v1184, %v1180
        %v1251 = vpack.c.bf16 %v1186, %v1182
        %v1252 = vpack.c.bf16 %v1194, %v1190
        %v1253 = vpack.c.bf16 %v1196, %v1192
        %v1254 = vpack.c.bf16 %v1204, %v1200
        %v1255 = vpack.c.bf16 %v1206, %v1202
        %v1256 = vpack.c.bf16 %v1214, %v1210
        %v1257 = vpack.c.bf16 %v1216, %v1212
        %v1258 = vpack.c.bf16 %v1224, %v1220
        %v1259 = vpack.c.bf16 %v1226, %v1222
        %1260 = vst [vmem:[#allocation3] sm:$0xff] %v1228
        %1261 = vst [vmem:[#allocation3 + $0x8] sm:$0xff] %v1229
        %1262 = vst [vmem:[#allocation3 + $0x10] sm:$0xff] %v1230
        %1263 = vst [vmem:[#allocation3 + $0x18] sm:$0xff] %v1231
        %1264 = vst [vmem:[#allocation3 + $0x20] sm:$0xff] %v1232
        %1265 = vst [vmem:[#allocation3 + $0x28] sm:$0xff] %v1233
        %1266 = vst [vmem:[#allocation3 + $0x30] sm:$0xff] %v1234
        %1267 = vst [vmem:[#allocation3 + $0x38] sm:$0xff] %v1235
        %1268 = vst [vmem:[#allocation3 + $0x40] sm:$0xff] %v1236
        %1269 = vst [vmem:[#allocation3 + $0x48] sm:$0xff] %v1237
        %1270 = vst [vmem:[#allocation3 + $0x50] sm:$0xff] %v1238
        %1271 = vst [vmem:[#allocation3 + $0x58] sm:$0xff] %v1239
        %1272 = vst [vmem:[#allocation3 + $0x60] sm:$0xff] %v1240
        %1273 = vst [vmem:[#allocation3 + $0x68] sm:$0xff] %v1241
        %1274 = vst [vmem:[#allocation3 + $0x70] sm:$0xff] %v1242
        %1275 = vst [vmem:[#allocation3 + $0x78] sm:$0xff] %v1243
        %1276 = vst [vmem:[#allocation4] sm:$0xff] %v1244
        %1277 = vst [vmem:[#allocation4 + $0x8] sm:$0xff] %v1245
        %1278 = vst [vmem:[#allocation4 + $0x10] sm:$0xff] %v1246
        %1279 = vst [vmem:[#allocation4 + $0x18] sm:$0xff] %v1247
        %1280 = vst [vmem:[#allocation4 + $0x20] sm:$0xff] %v1248
        %1281 = vst [vmem:[#allocation4 + $0x28] sm:$0xff] %v1249
        %1282 = vst [vmem:[#allocation4 + $0x30] sm:$0xff] %v1250
        %1283 = vst [vmem:[#allocation4 + $0x38] sm:$0xff] %v1251
        %1284 = vst [vmem:[#allocation4 + $0x40] sm:$0xff] %v1252
        %1285 = vst [vmem:[#allocation4 + $0x48] sm:$0xff] %v1253
        %1286 = vst [vmem:[#allocation4 + $0x50] sm:$0xff] %v1254
        %1287 = vst [vmem:[#allocation4 + $0x58] sm:$0xff] %v1255
        %1288 = vst [vmem:[#allocation4 + $0x60] sm:$0xff] %v1256
        %1289 = vst [vmem:[#allocation4 + $0x68] sm:$0xff] %v1257
        %1290 = vst [vmem:[#allocation4 + $0x70] sm:$0xff] %v1258
        %1291 = vst [vmem:[#allocation4 + $0x78] sm:$0xff] %v1259
        loop: start=0, step=1, limit=4
        $region49: #{tpu_custom_call.1} parent=47 // loop_pre_header
          _
        $region50: #{tpu_custom_call.1} parent=47 // loop_header
          %s1293 = sphi 0, %s1297
          %p1294 = scmp.ge.s32.totalorder %s1293, 4
        $region51: #{tpu_custom_call.1} parent=47 // loop_header_branch
          %1296 = sbr.rel (%p1294) target = $region55
        $region52: #{tpu_custom_call.1} parent=47 // loop_body
          %s1298 = smul.u32 %s1293, 32
          %s1299 = sshra.s32 %s1298, 4
          %s1300 = sand.u32 %s1298, 15
          %s1301 = smul.u32 %s1299, 2
          %s1302 = smul.addr %s1301, 8
          %s1303 = scalar_lea.vmem [#allocation2], %s1302
          %v1304 = vld [vmem:[%s1303] sm:$0xff]
          %v1305 = vld [vmem:[%s1303 + $0x8] sm:$0xff]
          %v1306 = vld [vmem:[%s1303 + $0x10] sm:$0xff]
          %v1307 = vld [vmem:[%s1303 + $0x18] sm:$0xff]
          %s1308 = smul.addr %s1301, 8
          %s1309 = scalar_lea.vmem [#allocation3], %s1308
          %v1310 = vld [vmem:[%s1309] sm:$0xff]
          %v1311 = vld [vmem:[%s1309 + $0x8] sm:$0xff]
          %v1312 = vld [vmem:[%s1309 + $0x10] sm:$0xff]
          %v1313 = vld [vmem:[%s1309 + $0x18] sm:$0xff]
          %s1314 = smul.addr %s1301, 8
          %s1315 = scalar_lea.vmem [#allocation4], %s1314
          %v1316 = vld [vmem:[%s1315] sm:$0xff]
          %v1317 = vld [vmem:[%s1315 + $0x8] sm:$0xff]
          %v1318 = vld [vmem:[%s1315 + $0x10] sm:$0xff]
          %v1319 = vld [vmem:[%s1315 + $0x18] sm:$0xff]
          %1320 = vxpose.xlu0.c.b16.start [1/8] %v1304, 128
          %1321 = vxpose.xlu0.c.b16.cont [2/8] %v1306, 128
          %1322 = vxpose.xlu0.c.b16.cont [3/8] 0, 128
          %1323 = vxpose.xlu0.c.b16.cont [4/8] 0, 128
          %1324 = vxpose.xlu0.c.b16.cont [5/8] 0, 128
          %1325 = vxpose.xlu0.c.b16.cont [6/8] 0, 128
          %1326 = vxpose.xlu0.c.b16.cont [7/8] 0, 128
          %1327 = vxpose.xlu0.c.b16.end [8/8] 0, 128
          %v1328 = vpop.trf.xlu0
          %v1329 = vpop.trf.xlu0
          %v1330 = vpop.trf.xlu0
          %v1331 = vpop.trf.xlu0
          %v1332 = vpop.trf.xlu0
          %v1333 = vpop.trf.xlu0
          %v1334 = vpop.trf.xlu0
          %v1335 = vpop.trf.xlu0
          %1336 = vxpose.xlu0.c.b16.start [1/8] %v1305, 128
          %1337 = vxpose.xlu0.c.b16.cont [2/8] %v1307, 128
          %1338 = vxpose.xlu0.c.b16.cont [3/8] 0, 128
          %1339 = vxpose.xlu0.c.b16.cont [4/8] 0, 128
          %1340 = vxpose.xlu0.c.b16.cont [5/8] 0, 128
          %1341 = vxpose.xlu0.c.b16.cont [6/8] 0, 128
          %1342 = vxpose.xlu0.c.b16.cont [7/8] 0, 128
          %1343 = vxpose.xlu0.c.b16.end [8/8] 0, 128
          %v1344 = vpop.trf.xlu0
          %v1345 = vpop.trf.xlu0
          %v1346 = vpop.trf.xlu0
          %v1347 = vpop.trf.xlu0
          %v1348 = vpop.trf.xlu0
          %v1349 = vpop.trf.xlu0
          %v1350 = vpop.trf.xlu0
          %v1351 = vpop.trf.xlu0
          %vm1352 = vcmask 261120
          %v1354 = vsel %vm1352, %v1328, 0
          %v1357 = vsel %vm1352, %v1329, 0
          %v1360 = vsel %vm1352, %v1330, 0
          %v1363 = vsel %vm1352, %v1331, 0
          %v1366 = vsel %vm1352, %v1332, 0
          %v1369 = vsel %vm1352, %v1333, 0
          %v1372 = vsel %vm1352, %v1334, 0
          %v1375 = vsel %vm1352, %v1335, 0
          %v1378 = vsel %vm1352, %v1344, 0
          %v1381 = vsel %vm1352, %v1345, 0
          %v1384 = vsel %vm1352, %v1346, 0
          %v1387 = vsel %vm1352, %v1347, 0
          %v1390 = vsel %vm1352, %v1348, 0
          %v1393 = vsel %vm1352, %v1349, 0
          %v1396 = vsel %vm1352, %v1350, 0
          %v1399 = vsel %vm1352, %v1351, 0
          %1401 = vmatprep.subr.bf16.mxu0 %v1311
          %1402 = vmatpush1.bf16.msra.mxu0 %v1310
          %1403 = vmatprep.subr.bf16.mxu0 %v1313
          %1404 = vmatpush1.bf16.msra.mxu0 %v1312
          %1405 = vmatprep.subr.bf16.mxu0 0
          %1406 = vmatpush1.bf16.msra.mxu0 0
          %1407 = vmatprep.subr.bf16.mxu0 0
          %1408 = vmatpush1.bf16.msra.mxu0 0
          %1409 = vmatprep.subr.bf16.mxu0 0
          %1410 = vmatpush1.bf16.msra.mxu0 0
          %1411 = vmatprep.subr.bf16.mxu0 0
          %1412 = vmatpush1.bf16.msra.mxu0 0
          %1413 = vmatprep.subr.bf16.mxu0 0
          %1414 = vmatpush1.bf16.msra.mxu0 0
          %1415 = vmatprep.subr.bf16.mxu0 0
          %1416 = vmatpush1.bf16.msra.mxu0 0
          %1417 = vmatprep.subr.bf16.mxu0 0
          %1418 = vmatpush1.bf16.msra.mxu0 0
          %1419 = vmatprep.subr.bf16.mxu0 0
          %1420 = vmatpush1.bf16.msra.mxu0 0
          %1421 = vmatprep.subr.bf16.mxu0 0
          %1422 = vmatpush1.bf16.msra.mxu0 0
          %1423 = vmatprep.subr.bf16.mxu0 0
          %1424 = vmatpush1.bf16.msra.mxu0 0
          %1425 = vmatprep.subr.bf16.mxu0 0
          %1426 = vmatpush1.bf16.msra.mxu0 0
          %1427 = vmatprep.subr.bf16.mxu0 0
          %1428 = vmatpush1.bf16.msra.mxu0 0
          %1429 = vmatprep.subr.bf16.mxu0 0
          %1430 = vmatpush1.bf16.msra.mxu0 0
          %1431 = vmatprep.subr.bf16.mxu0 0
          %1432 = vmatpush1.bf16.msra.mxu0 0
          %1433 = vmatprep.mubr.bf16.mxu0 0
          %1434 = vmatmul.mubr.bf16.gmra.mrb[0].mxu0 %v1354
          %v1435 = vpop.f32.mrb[0].mxu0
          %v1436 = vadd.f32 0.0, %v1435
          %v1437 = vpop.f32.mrb[0].mxu0
          %v1438 = vadd.f32 0.0, %v1437
          %v1439 = vpop.f32.mrb[0].mxu0
          %v1440 = vadd.f32 0.0, %v1439
          %v1441 = vpop.f32.mrb[0].mxu0
          %v1442 = vadd.f32 0.0, %v1441
          %1443 = vmatprep.mubr.bf16.mxu0 0
          %1444 = vmatmul.mubr.bf16.gmra.mrb[0].mxu0 %v1357
          %v1445 = vpop.f32.mrb[0].mxu0
          %v1446 = vadd.f32 0.0, %v1445
          %v1447 = vpop.f32.mrb[0].mxu0
          %v1448 = vadd.f32 0.0, %v1447
          %v1449 = vpop.f32.mrb[0].mxu0
          %v1450 = vadd.f32 0.0, %v1449
          %v1451 = vpop.f32.mrb[0].mxu0
          %v1452 = vadd.f32 0.0, %v1451
          %1453 = vmatprep.mubr.bf16.mxu0 0
          %1454 = vmatmul.mubr.bf16.gmra.mrb[0].mxu0 %v1360
          %v1455 = vpop.f32.mrb[0].mxu0
          %v1456 = vadd.f32 0.0, %v1455
          %v1457 = vpop.f32.mrb[0].mxu0
          %v1458 = vadd.f32 0.0, %v1457
          %v1459 = vpop.f32.mrb[0].mxu0
          %v1460 = vadd.f32 0.0, %v1459
          %v1461 = vpop.f32.mrb[0].mxu0
          %v1462 = vadd.f32 0.0, %v1461
          %1463 = vmatprep.mubr.bf16.mxu0 0
          %1464 = vmatmul.mubr.bf16.gmra.mrb[0].mxu0 %v1363
          %v1465 = vpop.f32.mrb[0].mxu0
          %v1466 = vadd.f32 0.0, %v1465
          %v1467 = vpop.f32.mrb[0].mxu0
          %v1468 = vadd.f32 0.0, %v1467
          %v1469 = vpop.f32.mrb[0].mxu0
          %v1470 = vadd.f32 0.0, %v1469
          %v1471 = vpop.f32.mrb[0].mxu0
          %v1472 = vadd.f32 0.0, %v1471
          %1473 = vmatprep.mubr.bf16.mxu0 0
          %1474 = vmatmul.mubr.bf16.gmra.mrb[0].mxu0 %v1366
          %v1475 = vpop.f32.mrb[0].mxu0
          %v1476 = vadd.f32 0.0, %v1475
          %v1477 = vpop.f32.mrb[0].mxu0
          %v1478 = vadd.f32 0.0, %v1477
          %v1479 = vpop.f32.mrb[0].mxu0
          %v1480 = vadd.f32 0.0, %v1479
          %v1481 = vpop.f32.mrb[0].mxu0
          %v1482 = vadd.f32 0.0, %v1481
          %1483 = vmatprep.mubr.bf16.mxu0 0
          %1484 = vmatmul.mubr.bf16.gmra.mrb[0].mxu0 %v1369
          %v1485 = vpop.f32.mrb[0].mxu0
          %v1486 = vadd.f32 0.0, %v1485
          %v1487 = vpop.f32.mrb[0].mxu0
          %v1488 = vadd.f32 0.0, %v1487
          %v1489 = vpop.f32.mrb[0].mxu0
          %v1490 = vadd.f32 0.0, %v1489
          %v1491 = vpop.f32.mrb[0].mxu0
          %v1492 = vadd.f32 0.0, %v1491
          %1493 = vmatprep.mubr.bf16.mxu0 0
          %1494 = vmatmul.mubr.bf16.gmra.mrb[0].mxu0 %v1372
          %v1495 = vpop.f32.mrb[0].mxu0
          %v1496 = vadd.f32 0.0, %v1495
          %v1497 = vpop.f32.mrb[0].mxu0
          %v1498 = vadd.f32 0.0, %v1497
          %v1499 = vpop.f32.mrb[0].mxu0
          %v1500 = vadd.f32 0.0, %v1499
          %v1501 = vpop.f32.mrb[0].mxu0
          %v1502 = vadd.f32 0.0, %v1501
          %1503 = vmatprep.mubr.bf16.mxu0 0
          %1504 = vmatmul.mubr.bf16.gmra.mrb[0].mxu0 %v1375
          %v1505 = vpop.f32.mrb[0].mxu0
          %v1506 = vadd.f32 0.0, %v1505
          %v1507 = vpop.f32.mrb[0].mxu0
          %v1508 = vadd.f32 0.0, %v1507
          %v1509 = vpop.f32.mrb[0].mxu0
          %v1510 = vadd.f32 0.0, %v1509
          %v1511 = vpop.f32.mrb[0].mxu0
          %v1512 = vadd.f32 0.0, %v1511
          %1513 = vmatprep.mubr.bf16.mxu0 0
          %1514 = vmatmul.mubr.bf16.gmra.mrb[0].mxu0 %v1378
          %v1515 = vpop.f32.mrb[0].mxu0
          %v1516 = vadd.f32 0.0, %v1515
          %v1517 = vpop.f32.mrb[0].mxu0
          %v1518 = vadd.f32 0.0, %v1517
          %v1519 = vpop.f32.mrb[0].mxu0
          %v1520 = vadd.f32 0.0, %v1519
          %v1521 = vpop.f32.mrb[0].mxu0
          %v1522 = vadd.f32 0.0, %v1521
          %1523 = vmatprep.mubr.bf16.mxu0 0
          %1524 = vmatmul.mubr.bf16.gmra.mrb[0].mxu0 %v1381
          %v1525 = vpop.f32.mrb[0].mxu0
          %v1526 = vadd.f32 0.0, %v1525
          %v1527 = vpop.f32.mrb[0].mxu0
          %v1528 = vadd.f32 0.0, %v1527
          %v1529 = vpop.f32.mrb[0].mxu0
          %v1530 = vadd.f32 0.0, %v1529
          %v1531 = vpop.f32.mrb[0].mxu0
          %v1532 = vadd.f32 0.0, %v1531
          %1533 = vmatprep.mubr.bf16.mxu0 0
          %1534 = vmatmul.mubr.bf16.gmra.mrb[0].mxu0 %v1384
          %v1535 = vpop.f32.mrb[0].mxu0
          %v1536 = vadd.f32 0.0, %v1535
          %v1537 = vpop.f32.mrb[0].mxu0
          %v1538 = vadd.f32 0.0, %v1537
          %v1539 = vpop.f32.mrb[0].mxu0
          %v1540 = vadd.f32 0.0, %v1539
          %v1541 = vpop.f32.mrb[0].mxu0
          %v1542 = vadd.f32 0.0, %v1541
          %1543 = vmatprep.mubr.bf16.mxu0 0
          %1544 = vmatmul.mubr.bf16.gmra.mrb[0].mxu0 %v1387
          %v1545 = vpop.f32.mrb[0].mxu0
          %v1546 = vadd.f32 0.0, %v1545
          %v1547 = vpop.f32.mrb[0].mxu0
          %v1548 = vadd.f32 0.0, %v1547
          %v1549 = vpop.f32.mrb[0].mxu0
          %v1550 = vadd.f32 0.0, %v1549
          %v1551 = vpop.f32.mrb[0].mxu0
          %v1552 = vadd.f32 0.0, %v1551
          %1553 = vmatprep.mubr.bf16.mxu0 0
          %1554 = vmatmul.mubr.bf16.gmra.mrb[0].mxu0 %v1390
          %v1555 = vpop.f32.mrb[0].mxu0
          %v1556 = vadd.f32 0.0, %v1555
          %v1557 = vpop.f32.mrb[0].mxu0
          %v1558 = vadd.f32 0.0, %v1557
          %v1559 = vpop.f32.mrb[0].mxu0
          %v1560 = vadd.f32 0.0, %v1559
          %v1561 = vpop.f32.mrb[0].mxu0
          %v1562 = vadd.f32 0.0, %v1561
          %1563 = vmatprep.mubr.bf16.mxu0 0
          %1564 = vmatmul.mubr.bf16.gmra.mrb[0].mxu0 %v1393
          %v1565 = vpop.f32.mrb[0].mxu0
          %v1566 = vadd.f32 0.0, %v1565
          %v1567 = vpop.f32.mrb[0].mxu0
          %v1568 = vadd.f32 0.0, %v1567
          %v1569 = vpop.f32.mrb[0].mxu0
          %v1570 = vadd.f32 0.0, %v1569
          %v1571 = vpop.f32.mrb[0].mxu0
          %v1572 = vadd.f32 0.0, %v1571
          %1573 = vmatprep.mubr.bf16.mxu0 0
          %1574 = vmatmul.mubr.bf16.gmra.mrb[0].mxu0 %v1396
          %v1575 = vpop.f32.mrb[0].mxu0
          %v1576 = vadd.f32 0.0, %v1575
          %v1577 = vpop.f32.mrb[0].mxu0
          %v1578 = vadd.f32 0.0, %v1577
          %v1579 = vpop.f32.mrb[0].mxu0
          %v1580 = vadd.f32 0.0, %v1579
          %v1581 = vpop.f32.mrb[0].mxu0
          %v1582 = vadd.f32 0.0, %v1581
          %1583 = vmatprep.mubr.bf16.mxu0 0
          %1584 = vmatmul.mubr.bf16.gmra.mrb[0].mxu0 %v1399
          %v1585 = vpop.f32.mrb[0].mxu0
          %v1586 = vadd.f32 0.0, %v1585
          %v1587 = vpop.f32.mrb[0].mxu0
          %v1588 = vadd.f32 0.0, %v1587
          %v1589 = vpop.f32.mrb[0].mxu0
          %v1590 = vadd.f32 0.0, %v1589
          %v1591 = vpop.f32.mrb[0].mxu0
          %v1592 = vadd.f32 0.0, %v1591
          %1593 = vdwg.mxu0
          %v1594 = vmax.f32 %v1436, %v1438
          %1595 = vmax.xlane.f32.xlu0 %v1594
          %v1596 = vpop.xlane.xlu0 %1595
          %v1597 = vmax.f32 %v1440, %v1442
          %1598 = vmax.xlane.f32.xlu0 %v1597
          %v1599 = vpop.xlane.xlu0 %1598
          %v1600 = vmax.f32 %v1446, %v1448
          %1601 = vmax.xlane.f32.xlu0 %v1600
          %v1602 = vpop.xlane.xlu0 %1601
          %v1603 = vmax.f32 %v1450, %v1452
          %1604 = vmax.xlane.f32.xlu0 %v1603
          %v1605 = vpop.xlane.xlu0 %1604
          %v1606 = vmax.f32 %v1456, %v1458
          %1607 = vmax.xlane.f32.xlu0 %v1606
          %v1608 = vpop.xlane.xlu0 %1607
          %v1609 = vmax.f32 %v1460, %v1462
          %1610 = vmax.xlane.f32.xlu0 %v1609
          %v1611 = vpop.xlane.xlu0 %1610
          %v1612 = vmax.f32 %v1466, %v1468
          %1613 = vmax.xlane.f32.xlu0 %v1612
          %v1614 = vpop.xlane.xlu0 %1613
          %v1615 = vmax.f32 %v1470, %v1472
          %1616 = vmax.xlane.f32.xlu0 %v1615
          %v1617 = vpop.xlane.xlu0 %1616
          %v1618 = vmax.f32 %v1476, %v1478
          %1619 = vmax.xlane.f32.xlu0 %v1618
          %v1620 = vpop.xlane.xlu0 %1619
          %v1621 = vmax.f32 %v1480, %v1482
          %1622 = vmax.xlane.f32.xlu0 %v1621
          %v1623 = vpop.xlane.xlu0 %1622
          %v1624 = vmax.f32 %v1486, %v1488
          %1625 = vmax.xlane.f32.xlu0 %v1624
          %v1626 = vpop.xlane.xlu0 %1625
          %v1627 = vmax.f32 %v1490, %v1492
          %1628 = vmax.xlane.f32.xlu0 %v1627
          %v1629 = vpop.xlane.xlu0 %1628
          %v1630 = vmax.f32 %v1496, %v1498
          %1631 = vmax.xlane.f32.xlu0 %v1630
          %v1632 = vpop.xlane.xlu0 %1631
          %v1633 = vmax.f32 %v1500, %v1502
          %1634 = vmax.xlane.f32.xlu0 %v1633
          %v1635 = vpop.xlane.xlu0 %1634
          %v1636 = vmax.f32 %v1506, %v1508
          %1637 = vmax.xlane.f32.xlu0 %v1636
          %v1638 = vpop.xlane.xlu0 %1637
          %v1639 = vmax.f32 %v1510, %v1512
          %1640 = vmax.xlane.f32.xlu0 %v1639
          %v1641 = vpop.xlane.xlu0 %1640
          %v1642 = vmax.f32 %v1516, %v1518
          %1643 = vmax.xlane.f32.xlu0 %v1642
          %v1644 = vpop.xlane.xlu0 %1643
          %v1645 = vmax.f32 %v1520, %v1522
          %1646 = vmax.xlane.f32.xlu0 %v1645
          %v1647 = vpop.xlane.xlu0 %1646
          %v1648 = vmax.f32 %v1526, %v1528
          %1649 = vmax.xlane.f32.xlu0 %v1648
          %v1650 = vpop.xlane.xlu0 %1649
          %v1651 = vmax.f32 %v1530, %v1532
          %1652 = vmax.xlane.f32.xlu0 %v1651
          %v1653 = vpop.xlane.xlu0 %1652
          %v1654 = vmax.f32 %v1536, %v1538
          %1655 = vmax.xlane.f32.xlu0 %v1654
          %v1656 = vpop.xlane.xlu0 %1655
          %v1657 = vmax.f32 %v1540, %v1542
          %1658 = vmax.xlane.f32.xlu0 %v1657
          %v1659 = vpop.xlane.xlu0 %1658
          %v1660 = vmax.f32 %v1546, %v1548
          %1661 = vmax.xlane.f32.xlu0 %v1660
          %v1662 = vpop.xlane.xlu0 %1661
          %v1663 = vmax.f32 %v1550, %v1552
          %1664 = vmax.xlane.f32.xlu0 %v1663
          %v1665 = vpop.xlane.xlu0 %1664
          %v1666 = vmax.f32 %v1556, %v1558
          %1667 = vmax.xlane.f32.xlu0 %v1666
          %v1668 = vpop.xlane.xlu0 %1667
          %v1669 = vmax.f32 %v1560, %v1562
          %1670 = vmax.xlane.f32.xlu0 %v1669
          %v1671 = vpop.xlane.xlu0 %1670
          %v1672 = vmax.f32 %v1566, %v1568
          %1673 = vmax.xlane.f32.xlu0 %v1672
          %v1674 = vpop.xlane.xlu0 %1673
          %v1675 = vmax.f32 %v1570, %v1572
          %1676 = vmax.xlane.f32.xlu0 %v1675
          %v1677 = vpop.xlane.xlu0 %1676
          %v1678 = vmax.f32 %v1576, %v1578
          %1679 = vmax.xlane.f32.xlu0 %v1678
          %v1680 = vpop.xlane.xlu0 %1679
          %v1681 = vmax.f32 %v1580, %v1582
          %1682 = vmax.xlane.f32.xlu0 %v1681
          %v1683 = vpop.xlane.xlu0 %1682
          %v1684 = vmax.f32 %v1586, %v1588
          %1685 = vmax.xlane.f32.xlu0 %v1684
          %v1686 = vpop.xlane.xlu0 %1685
          %v1687 = vmax.f32 %v1590, %v1592
          %1688 = vmax.xlane.f32.xlu0 %v1687
          %v1689 = vpop.xlane.xlu0 %1688
          %v1690 = vsub.f32 %v1436, %v1596
          %v1691 = vsub.f32 %v1438, %v1596
          %v1692 = vsub.f32 %v1440, %v1599
          %v1693 = vsub.f32 %v1442, %v1599
          %v1694 = vsub.f32 %v1446, %v1602
          %v1695 = vsub.f32 %v1448, %v1602
          %v1696 = vsub.f32 %v1450, %v1605
          %v1697 = vsub.f32 %v1452, %v1605
          %v1698 = vsub.f32 %v1456, %v1608
          %v1699 = vsub.f32 %v1458, %v1608
          %v1700 = vsub.f32 %v1460, %v1611
          %v1701 = vsub.f32 %v1462, %v1611
          %v1702 = vsub.f32 %v1466, %v1614
          %v1703 = vsub.f32 %v1468, %v1614
          %v1704 = vsub.f32 %v1470, %v1617
          %v1705 = vsub.f32 %v1472, %v1617
          %v1706 = vsub.f32 %v1476, %v1620
          %v1707 = vsub.f32 %v1478, %v1620
          %v1708 = vsub.f32 %v1480, %v1623
          %v1709 = vsub.f32 %v1482, %v1623
          %v1710 = vsub.f32 %v1486, %v1626
          %v1711 = vsub.f32 %v1488, %v1626
          %v1712 = vsub.f32 %v1490, %v1629
          %v1713 = vsub.f32 %v1492, %v1629
          %v1714 = vsub.f32 %v1496, %v1632
          %v1715 = vsub.f32 %v1498, %v1632
          %v1716 = vsub.f32 %v1500, %v1635
          %v1717 = vsub.f32 %v1502, %v1635
          %v1718 = vsub.f32 %v1506, %v1638
          %v1719 = vsub.f32 %v1508, %v1638
          %v1720 = vsub.f32 %v1510, %v1641
          %v1721 = vsub.f32 %v1512, %v1641
          %v1722 = vsub.f32 %v1516, %v1644
          %v1723 = vsub.f32 %v1518, %v1644
          %v1724 = vsub.f32 %v1520, %v1647
          %v1725 = vsub.f32 %v1522, %v1647
          %v1726 = vsub.f32 %v1526, %v1650
          %v1727 = vsub.f32 %v1528, %v1650
          %v1728 = vsub.f32 %v1530, %v1653
          %v1729 = vsub.f32 %v1532, %v1653
          %v1730 = vsub.f32 %v1536, %v1656
          %v1731 = vsub.f32 %v1538, %v1656
          %v1732 = vsub.f32 %v1540, %v1659
          %v1733 = vsub.f32 %v1542, %v1659
          %v1734 = vsub.f32 %v1546, %v1662
          %v1735 = vsub.f32 %v1548, %v1662
          %v1736 = vsub.f32 %v1550, %v1665
          %v1737 = vsub.f32 %v1552, %v1665
          %v1738 = vsub.f32 %v1556, %v1668
          %v1739 = vsub.f32 %v1558, %v1668
          %v1740 = vsub.f32 %v1560, %v1671
          %v1741 = vsub.f32 %v1562, %v1671
          %v1742 = vsub.f32 %v1566, %v1674
          %v1743 = vsub.f32 %v1568, %v1674
          %v1744 = vsub.f32 %v1570, %v1677
          %v1745 = vsub.f32 %v1572, %v1677
          %v1746 = vsub.f32 %v1576, %v1680
          %v1747 = vsub.f32 %v1578, %v1680
          %v1748 = vsub.f32 %v1580, %v1683
          %v1749 = vsub.f32 %v1582, %v1683
          %v1750 = vsub.f32 %v1586, %v1686
          %v1751 = vsub.f32 %v1588, %v1686
          %v1752 = vsub.f32 %v1590, %v1689
          %v1753 = vsub.f32 %v1592, %v1689
          %v1754 = vmul.f32 %v1690, 1.442695
          %v1755 = vpow.pop %v1754
          %v1756 = vmul.f32 %v1691, 1.442695
          %v1757 = vpow.pop %v1756
          %v1758 = vmul.f32 %v1692, 1.442695
          %v1759 = vpow.pop %v1758
          %v1760 = vmul.f32 %v1693, 1.442695
          %v1761 = vpow.pop %v1760
          %v1762 = vmul.f32 %v1694, 1.442695
          %v1763 = vpow.pop %v1762
          %v1764 = vmul.f32 %v1695, 1.442695
          %v1765 = vpow.pop %v1764
          %v1766 = vmul.f32 %v1696, 1.442695
          %v1767 = vpow.pop %v1766
          %v1768 = vmul.f32 %v1697, 1.442695
          %v1769 = vpow.pop %v1768
          %v1770 = vmul.f32 %v1698, 1.442695
          %v1771 = vpow.pop %v1770
          %v1772 = vmul.f32 %v1699, 1.442695
          %v1773 = vpow.pop %v1772
          %v1774 = vmul.f32 %v1700, 1.442695
          %v1775 = vpow.pop %v1774
          %v1776 = vmul.f32 %v1701, 1.442695
          %v1777 = vpow.pop %v1776
          %v1778 = vmul.f32 %v1702, 1.442695
          %v1779 = vpow.pop %v1778
          %v1780 = vmul.f32 %v1703, 1.442695
          %v1781 = vpow.pop %v1780
          %v1782 = vmul.f32 %v1704, 1.442695
          %v1783 = vpow.pop %v1782
          %v1784 = vmul.f32 %v1705, 1.442695
          %v1785 = vpow.pop %v1784
          %v1786 = vmul.f32 %v1706, 1.442695
          %v1787 = vpow.pop %v1786
          %v1788 = vmul.f32 %v1707, 1.442695
          %v1789 = vpow.pop %v1788
          %v1790 = vmul.f32 %v1708, 1.442695
          %v1791 = vpow.pop %v1790
          %v1792 = vmul.f32 %v1709, 1.442695
          %v1793 = vpow.pop %v1792
          %v1794 = vmul.f32 %v1710, 1.442695
          %v1795 = vpow.pop %v1794
          %v1796 = vmul.f32 %v1711, 1.442695
          %v1797 = vpow.pop %v1796
          %v1798 = vmul.f32 %v1712, 1.442695
          %v1799 = vpow.pop %v1798
          %v1800 = vmul.f32 %v1713, 1.442695
          %v1801 = vpow.pop %v1800
          %v1802 = vmul.f32 %v1714, 1.442695
          %v1803 = vpow.pop %v1802
          %v1804 = vmul.f32 %v1715, 1.442695
          %v1805 = vpow.pop %v1804
          %v1806 = vmul.f32 %v1716, 1.442695
          %v1807 = vpow.pop %v1806
          %v1808 = vmul.f32 %v1717, 1.442695
          %v1809 = vpow.pop %v1808
          %v1810 = vmul.f32 %v1718, 1.442695
          %v1811 = vpow.pop %v1810
          %v1812 = vmul.f32 %v1719, 1.442695
          %v1813 = vpow.pop %v1812
          %v1814 = vmul.f32 %v1720, 1.442695
          %v1815 = vpow.pop %v1814
          %v1816 = vmul.f32 %v1721, 1.442695
          %v1817 = vpow.pop %v1816
          %v1818 = vmul.f32 %v1722, 1.442695
          %v1819 = vpow.pop %v1818
          %v1820 = vmul.f32 %v1723, 1.442695
          %v1821 = vpow.pop %v1820
          %v1822 = vmul.f32 %v1724, 1.442695
          %v1823 = vpow.pop %v1822
          %v1824 = vmul.f32 %v1725, 1.442695
          %v1825 = vpow.pop %v1824
          %v1826 = vmul.f32 %v1726, 1.442695
          %v1827 = vpow.pop %v1826
          %v1828 = vmul.f32 %v1727, 1.442695
          %v1829 = vpow.pop %v1828
          %v1830 = vmul.f32 %v1728, 1.442695
          %v1831 = vpow.pop %v1830
          %v1832 = vmul.f32 %v1729, 1.442695
          %v1833 = vpow.pop %v1832
          %v1834 = vmul.f32 %v1730, 1.442695
          %v1835 = vpow.pop %v1834
          %v1836 = vmul.f32 %v1731, 1.442695
          %v1837 = vpow.pop %v1836
          %v1838 = vmul.f32 %v1732, 1.442695
          %v1839 = vpow.pop %v1838
          %v1840 = vmul.f32 %v1733, 1.442695
          %v1841 = vpow.pop %v1840
          %v1842 = vmul.f32 %v1734, 1.442695
          %v1843 = vpow.pop %v1842
          %v1844 = vmul.f32 %v1735, 1.442695
          %v1845 = vpow.pop %v1844
          %v1846 = vmul.f32 %v1736, 1.442695
          %v1847 = vpow.pop %v1846
          %v1848 = vmul.f32 %v1737, 1.442695
          %v1849 = vpow.pop %v1848
          %v1850 = vmul.f32 %v1738, 1.442695
          %v1851 = vpow.pop %v1850
          %v1852 = vmul.f32 %v1739, 1.442695
          %v1853 = vpow.pop %v1852
          %v1854 = vmul.f32 %v1740, 1.442695
          %v1855 = vpow.pop %v1854
          %v1856 = vmul.f32 %v1741, 1.442695
          %v1857 = vpow.pop %v1856
          %v1858 = vmul.f32 %v1742, 1.442695
          %v1859 = vpow.pop %v1858
          %v1860 = vmul.f32 %v1743, 1.442695
          %v1861 = vpow.pop %v1860
          %v1862 = vmul.f32 %v1744, 1.442695
          %v1863 = vpow.pop %v1862
          %v1864 = vmul.f32 %v1745, 1.442695
          %v1865 = vpow.pop %v1864
          %v1866 = vmul.f32 %v1746, 1.442695
          %v1867 = vpow.pop %v1866
          %v1868 = vmul.f32 %v1747, 1.442695
          %v1869 = vpow.pop %v1868
          %v1870 = vmul.f32 %v1748, 1.442695
          %v1871 = vpow.pop %v1870
          %v1872 = vmul.f32 %v1749, 1.442695
          %v1873 = vpow.pop %v1872
          %v1874 = vmul.f32 %v1750, 1.442695
          %v1875 = vpow.pop %v1874
          %v1876 = vmul.f32 %v1751, 1.442695
          %v1877 = vpow.pop %v1876
          %v1878 = vmul.f32 %v1752, 1.442695
          %v1879 = vpow.pop %v1878
          %v1880 = vmul.f32 %v1753, 1.442695
          %v1881 = vpow.pop %v1880
          %v1882 = vadd.f32 %v1755, %v1757
          %1883 = vadd.xlane.f32.xlu0 %v1882
          %v1884 = vpop.xlane.xlu0 %1883
          %v1885 = vadd.f32 %v1759, %v1761
          %1886 = vadd.xlane.f32.xlu0 %v1885
          %v1887 = vpop.xlane.xlu0 %1886
          %v1888 = vadd.f32 %v1763, %v1765
          %1889 = vadd.xlane.f32.xlu0 %v1888
          %v1890 = vpop.xlane.xlu0 %1889
          %v1891 = vadd.f32 %v1767, %v1769
          %1892 = vadd.xlane.f32.xlu0 %v1891
          %v1893 = vpop.xlane.xlu0 %1892
          %v1894 = vadd.f32 %v1771, %v1773
          %1895 = vadd.xlane.f32.xlu0 %v1894
          %v1896 = vpop.xlane.xlu0 %1895
          %v1897 = vadd.f32 %v1775, %v1777
          %1898 = vadd.xlane.f32.xlu0 %v1897
          %v1899 = vpop.xlane.xlu0 %1898
          %v1900 = vadd.f32 %v1779, %v1781
          %1901 = vadd.xlane.f32.xlu0 %v1900
          %v1902 = vpop.xlane.xlu0 %1901
          %v1903 = vadd.f32 %v1783, %v1785
          %1904 = vadd.xlane.f32.xlu0 %v1903
          %v1905 = vpop.xlane.xlu0 %1904
          %v1906 = vadd.f32 %v1787, %v1789
          %1907 = vadd.xlane.f32.xlu0 %v1906
          %v1908 = vpop.xlane.xlu0 %1907
          %v1909 = vadd.f32 %v1791, %v1793
          %1910 = vadd.xlane.f32.xlu0 %v1909
          %v1911 = vpop.xlane.xlu0 %1910
          %v1912 = vadd.f32 %v1795, %v1797
          %1913 = vadd.xlane.f32.xlu0 %v1912
          %v1914 = vpop.xlane.xlu0 %1913
          %v1915 = vadd.f32 %v1799, %v1801
          %1916 = vadd.xlane.f32.xlu0 %v1915
          %v1917 = vpop.xlane.xlu0 %1916
          %v1918 = vadd.f32 %v1803, %v1805
          %1919 = vadd.xlane.f32.xlu0 %v1918
          %v1920 = vpop.xlane.xlu0 %1919
          %v1921 = vadd.f32 %v1807, %v1809
          %1922 = vadd.xlane.f32.xlu0 %v1921
          %v1923 = vpop.xlane.xlu0 %1922
          %v1924 = vadd.f32 %v1811, %v1813
          %1925 = vadd.xlane.f32.xlu0 %v1924
          %v1926 = vpop.xlane.xlu0 %1925
          %v1927 = vadd.f32 %v1815, %v1817
          %1928 = vadd.xlane.f32.xlu0 %v1927
          %v1929 = vpop.xlane.xlu0 %1928
          %v1930 = vadd.f32 %v1819, %v1821
          %1931 = vadd.xlane.f32.xlu0 %v1930
          %v1932 = vpop.xlane.xlu0 %1931
          %v1933 = vadd.f32 %v1823, %v1825
          %1934 = vadd.xlane.f32.xlu0 %v1933
          %v1935 = vpop.xlane.xlu0 %1934
          %v1936 = vadd.f32 %v1827, %v1829
          %1937 = vadd.xlane.f32.xlu0 %v1936
          %v1938 = vpop.xlane.xlu0 %1937
          %v1939 = vadd.f32 %v1831, %v1833
          %1940 = vadd.xlane.f32.xlu0 %v1939
          %v1941 = vpop.xlane.xlu0 %1940
          %v1942 = vadd.f32 %v1835, %v1837
          %1943 = vadd.xlane.f32.xlu0 %v1942
          %v1944 = vpop.xlane.xlu0 %1943
          %v1945 = vadd.f32 %v1839, %v1841
          %1946 = vadd.xlane.f32.xlu0 %v1945
          %v1947 = vpop.xlane.xlu0 %1946
          %v1948 = vadd.f32 %v1843, %v1845
          %1949 = vadd.xlane.f32.xlu0 %v1948
          %v1950 = vpop.xlane.xlu0 %1949
          %v1951 = vadd.f32 %v1847, %v1849
          %1952 = vadd.xlane.f32.xlu0 %v1951
          %v1953 = vpop.xlane.xlu0 %1952
          %v1954 = vadd.f32 %v1851, %v1853
          %1955 = vadd.xlane.f32.xlu0 %v1954
          %v1956 = vpop.xlane.xlu0 %1955
          %v1957 = vadd.f32 %v1855, %v1857
          %1958 = vadd.xlane.f32.xlu0 %v1957
          %v1959 = vpop.xlane.xlu0 %1958
          %v1960 = vadd.f32 %v1859, %v1861
          %1961 = vadd.xlane.f32.xlu0 %v1960
          %v1962 = vpop.xlane.xlu0 %1961
          %v1963 = vadd.f32 %v1863, %v1865
          %1964 = vadd.xlane.f32.xlu0 %v1963
          %v1965 = vpop.xlane.xlu0 %1964
          %v1966 = vadd.f32 %v1867, %v1869
          %1967 = vadd.xlane.f32.xlu0 %v1966
          %v1968 = vpop.xlane.xlu0 %1967
          %v1969 = vadd.f32 %v1871, %v1873
          %1970 = vadd.xlane.f32.xlu0 %v1969
          %v1971 = vpop.xlane.xlu0 %1970
          %v1972 = vadd.f32 %v1875, %v1877
          %1973 = vadd.xlane.f32.xlu0 %v1972
          %v1974 = vpop.xlane.xlu0 %1973
          %v1975 = vadd.f32 %v1879, %v1881
          %1976 = vadd.xlane.f32.xlu0 %v1975
          %v1977 = vpop.xlane.xlu0 %1976
          %v1978 = vrcp.pop %v1884
          %v1979 = vrcp.pop %v1887
          %v1980 = vrcp.pop %v1890
          %v1981 = vrcp.pop %v1893
          %v1982 = vrcp.pop %v1896
          %v1983 = vrcp.pop %v1899
          %v1984 = vrcp.pop %v1902
          %v1985 = vrcp.pop %v1905
          %v1986 = vrcp.pop %v1908
          %v1987 = vrcp.pop %v1911
          %v1988 = vrcp.pop %v1914
          %v1989 = vrcp.pop %v1917
          %v1990 = vrcp.pop %v1920
          %v1991 = vrcp.pop %v1923
          %v1992 = vrcp.pop %v1926
          %v1993 = vrcp.pop %v1929
          %v1994 = vrcp.pop %v1932
          %v1995 = vrcp.pop %v1935
          %v1996 = vrcp.pop %v1938
          %v1997 = vrcp.pop %v1941
          %v1998 = vrcp.pop %v1944
          %v1999 = vrcp.pop %v1947
          %v2000 = vrcp.pop %v1950
          %v2001 = vrcp.pop %v1953
          %v2002 = vrcp.pop %v1956
          %v2003 = vrcp.pop %v1959
          %v2004 = vrcp.pop %v1962
          %v2005 = vrcp.pop %v1965
          %v2006 = vrcp.pop %v1968
          %v2007 = vrcp.pop %v1971
          %v2008 = vrcp.pop %v1974
          %v2009 = vrcp.pop %v1977
          %v2010 = vmul.f32 %v1755, %v1978
          %v2011 = vmul.f32 %v1757, %v1978
          %v2012 = vmul.f32 %v1759, %v1979
          %v2013 = vmul.f32 %v1761, %v1979
          %v2014 = vmul.f32 %v1763, %v1980
          %v2015 = vmul.f32 %v1765, %v1980
          %v2016 = vmul.f32 %v1767, %v1981
          %v2017 = vmul.f32 %v1769, %v1981
          %v2018 = vmul.f32 %v1771, %v1982
          %v2019 = vmul.f32 %v1773, %v1982
          %v2020 = vmul.f32 %v1775, %v1983
          %v2021 = vmul.f32 %v1777, %v1983
          %v2022 = vmul.f32 %v1779, %v1984
          %v2023 = vmul.f32 %v1781, %v1984
          %v2024 = vmul.f32 %v1783, %v1985
          %v2025 = vmul.f32 %v1785, %v1985
          %v2026 = vmul.f32 %v1787, %v1986
          %v2027 = vmul.f32 %v1789, %v1986
          %v2028 = vmul.f32 %v1791, %v1987
          %v2029 = vmul.f32 %v1793, %v1987
          %v2030 = vmul.f32 %v1795, %v1988
          %v2031 = vmul.f32 %v1797, %v1988
          %v2032 = vmul.f32 %v1799, %v1989
          %v2033 = vmul.f32 %v1801, %v1989
          %v2034 = vmul.f32 %v1803, %v1990
          %v2035 = vmul.f32 %v1805, %v1990
          %v2036 = vmul.f32 %v1807, %v1991
          %v2037 = vmul.f32 %v1809, %v1991
          %v2038 = vmul.f32 %v1811, %v1992
          %v2039 = vmul.f32 %v1813, %v1992
          %v2040 = vmul.f32 %v1815, %v1993
          %v2041 = vmul.f32 %v1817, %v1993
          %v2042 = vmul.f32 %v1819, %v1994
          %v2043 = vmul.f32 %v1821, %v1994
          %v2044 = vmul.f32 %v1823, %v1995
          %v2045 = vmul.f32 %v1825, %v1995
          %v2046 = vmul.f32 %v1827, %v1996
          %v2047 = vmul.f32 %v1829, %v1996
          %v2048 = vmul.f32 %v1831, %v1997
          %v2049 = vmul.f32 %v1833, %v1997
          %v2050 = vmul.f32 %v1835, %v1998
          %v2051 = vmul.f32 %v1837, %v1998
          %v2052 = vmul.f32 %v1839, %v1999
          %v2053 = vmul.f32 %v1841, %v1999
          %v2054 = vmul.f32 %v1843, %v2000
          %v2055 = vmul.f32 %v1845, %v2000
          %v2056 = vmul.f32 %v1847, %v2001
          %v2057 = vmul.f32 %v1849, %v2001
          %v2058 = vmul.f32 %v1851, %v2002
          %v2059 = vmul.f32 %v1853, %v2002
          %v2060 = vmul.f32 %v1855, %v2003
          %v2061 = vmul.f32 %v1857, %v2003
          %v2062 = vmul.f32 %v1859, %v2004
          %v2063 = vmul.f32 %v1861, %v2004
          %v2064 = vmul.f32 %v1863, %v2005
          %v2065 = vmul.f32 %v1865, %v2005
          %v2066 = vmul.f32 %v1867, %v2006
          %v2067 = vmul.f32 %v1869, %v2006
          %v2068 = vmul.f32 %v1871, %v2007
          %v2069 = vmul.f32 %v1873, %v2007
          %v2070 = vmul.f32 %v1875, %v2008
          %v2071 = vmul.f32 %v1877, %v2008
          %v2072 = vmul.f32 %v1879, %v2009
          %v2073 = vmul.f32 %v1881, %v2009
          %v2074 = vpack.c.bf16 %v2012, %v2010
          %v2075 = vpack.c.bf16 %v2013, %v2011
          %v2076 = vpack.c.bf16 %v2016, %v2014
          %v2077 = vpack.c.bf16 %v2017, %v2015
          %v2078 = vpack.c.bf16 %v2020, %v2018
          %v2079 = vpack.c.bf16 %v2021, %v2019
          %v2080 = vpack.c.bf16 %v2024, %v2022
          %v2081 = vpack.c.bf16 %v2025, %v2023
          %v2082 = vpack.c.bf16 %v2028, %v2026
          %v2083 = vpack.c.bf16 %v2029, %v2027
          %v2084 = vpack.c.bf16 %v2032, %v2030
          %v2085 = vpack.c.bf16 %v2033, %v2031
          %v2086 = vpack.c.bf16 %v2036, %v2034
          %v2087 = vpack.c.bf16 %v2037, %v2035
          %v2088 = vpack.c.bf16 %v2040, %v2038
          %v2089 = vpack.c.bf16 %v2041, %v2039
          %v2090 = vpack.c.bf16 %v2044, %v2042
          %v2091 = vpack.c.bf16 %v2045, %v2043
          %v2092 = vpack.c.bf16 %v2048, %v2046
          %v2093 = vpack.c.bf16 %v2049, %v2047
          %v2094 = vpack.c.bf16 %v2052, %v2050
          %v2095 = vpack.c.bf16 %v2053, %v2051
          %v2096 = vpack.c.bf16 %v2056, %v2054
          %v2097 = vpack.c.bf16 %v2057, %v2055
          %v2098 = vpack.c.bf16 %v2060, %v2058
          %v2099 = vpack.c.bf16 %v2061, %v2059
          %v2100 = vpack.c.bf16 %v2064, %v2062
          %v2101 = vpack.c.bf16 %v2065, %v2063
          %v2102 = vpack.c.bf16 %v2068, %v2066
          %v2103 = vpack.c.bf16 %v2069, %v2067
          %v2104 = vpack.c.bf16 %v2072, %v2070
          %v2105 = vpack.c.bf16 %v2073, %v2071
          %2106 = vmatprep.subr.bf16.mxu0 %v2075
          %2107 = vmatpush1.bf16.xpose.msra.mxu0 %v2074
          %2108 = vmatprep.subr.bf16.mxu0 %v2077
          %2109 = vmatpush1.bf16.xpose.msra.mxu0 %v2076
          %2110 = vmatprep.subr.bf16.mxu0 %v2079
          %2111 = vmatpush1.bf16.xpose.msra.mxu0 %v2078
          %2112 = vmatprep.subr.bf16.mxu0 %v2081
          %2113 = vmatpush1.bf16.xpose.msra.mxu0 %v2080
          %2114 = vmatprep.subr.bf16.mxu0 %v2083
          %2115 = vmatpush1.bf16.xpose.msra.mxu0 %v2082
          %2116 = vmatprep.subr.bf16.mxu0 %v2085
          %2117 = vmatpush1.bf16.xpose.msra.mxu0 %v2084
          %2118 = vmatprep.subr.bf16.mxu0 %v2087
          %2119 = vmatpush1.bf16.xpose.msra.mxu0 %v2086
          %2120 = vmatprep.subr.bf16.mxu0 %v2089
          %2121 = vmatpush1.bf16.xpose.msra.mxu0 %v2088
          %2122 = vmatprep.subr.bf16.mxu0 %v2091
          %2123 = vmatpush1.bf16.xpose.msra.mxu0 %v2090
          %2124 = vmatprep.subr.bf16.mxu0 %v2093
          %2125 = vmatpush1.bf16.xpose.msra.mxu0 %v2092
          %2126 = vmatprep.subr.bf16.mxu0 %v2095
          %2127 = vmatpush1.bf16.xpose.msra.mxu0 %v2094
          %2128 = vmatprep.subr.bf16.mxu0 %v2097
          %2129 = vmatpush1.bf16.xpose.msra.mxu0 %v2096
          %2130 = vmatprep.subr.bf16.mxu0 %v2099
          %2131 = vmatpush1.bf16.xpose.msra.mxu0 %v2098
          %2132 = vmatprep.subr.bf16.mxu0 %v2101
          %2133 = vmatpush1.bf16.xpose.msra.mxu0 %v2100
          %2134 = vmatprep.subr.bf16.mxu0 %v2103
          %2135 = vmatpush1.bf16.xpose.msra.mxu0 %v2102
          %2136 = vmatprep.subr.bf16.mxu0 %v2105
          %2137 = vmatpush1.bf16.xpose.msra.mxu0 %v2104
          %2138 = vmatprep.mubr.bf16.mxu0 %v1317
          %2139 = vmatmul.mubr.bf16.gmra.mrb[0].mxu0 %v1316
          %v2140 = vpop.f32.mrb[0].mxu0
          %v2141 = vadd.f32 0.0, %v2140
          %v2142 = vpop.f32.mrb[0].mxu0
          %v2143 = vadd.f32 0.0, %v2142
          %v2144 = vpop.f32.mrb[0].mxu0
          %v2145 = vadd.f32 0.0, %v2144
          %v2146 = vpop.f32.mrb[0].mxu0
          %v2147 = vadd.f32 0.0, %v2146
          %2148 = vmatprep.mubr.bf16.mxu0 %v1319
          %2149 = vmatmul.mubr.bf16.gmra.mrb[0].mxu0 %v1318
          %v2150 = vpop.f32.mrb[0].mxu0
          %v2151 = vadd.f32 0.0, %v2150
          %v2152 = vpop.f32.mrb[0].mxu0
          %v2153 = vadd.f32 0.0, %v2152
          %v2154 = vpop.f32.mrb[0].mxu0
          %v2155 = vadd.f32 0.0, %v2154
          %v2156 = vpop.f32.mrb[0].mxu0
          %v2157 = vadd.f32 0.0, %v2156
          %2158 = vdwg.mxu0
          %v2159 = vpack.c.bf16 %v2145, %v2141
          %v2160 = vpack.c.bf16 %v2147, %v2143
          %v2161 = vpack.c.bf16 %v2155, %v2151
          %v2162 = vpack.c.bf16 %v2157, %v2153
          %s2163 = smul.addr %s1301, 8
          %s2164 = scalar_lea.vmem [#allocation5], %s2163
          %2165 = vst [vmem:[%s2164] sm:$0xff] %v2159
          %2166 = vst [vmem:[%s2164 + $0x8] sm:$0xff] %v2160
          %2167 = vst [vmem:[%s2164 + $0x10] sm:$0xff] %v2161
          %2168 = vst [vmem:[%s2164 + $0x18] sm:$0xff] %v2162
        $region53: #{tpu_custom_call.1} parent=47 // loop_footer
          %s1297 = sadd.s32 1, %s1293
        $region54: #{tpu_custom_call.1} parent=47 // loop_footer_branch
          %1292 = sbr.rel target = $region50
        $region55: #{tpu_custom_call.1} parent=47 // loop_exit
          _
        %v2169 = vld [vmem:[%s4] sm:$0x3]
        %v2170 = vld [vmem:[#allocation5] sm:$0xff]
        %v2171 = vld [vmem:[#allocation5 + $0x8] sm:$0xff]
        %v2172 = vld [vmem:[#allocation5 + $0x10] sm:$0xff]
        %v2173 = vld [vmem:[#allocation5 + $0x18] sm:$0xff]
        %v2174 = vld [vmem:[#allocation5 + $0x20] sm:$0xff]
        %v2175 = vld [vmem:[#allocation5 + $0x28] sm:$0xff]
        %v2176 = vld [vmem:[#allocation5 + $0x30] sm:$0xff]
        %v2177 = vld [vmem:[#allocation5 + $0x38] sm:$0xff]
        %v2178 = vld [vmem:[#allocation5 + $0x40] sm:$0xff]
        %v2179 = vld [vmem:[#allocation5 + $0x48] sm:$0xff]
        %v2180 = vld [vmem:[#allocation5 + $0x50] sm:$0xff]
        %v2181 = vld [vmem:[#allocation5 + $0x58] sm:$0xff]
        %v2182 = vld [vmem:[#allocation5 + $0x60] sm:$0xff]
        %v2183 = vld [vmem:[#allocation5 + $0x68] sm:$0xff]
        %v2184 = vld [vmem:[#allocation5 + $0x70] sm:$0xff]
        %v2185 = vld [vmem:[#allocation5 + $0x78] sm:$0xff]
        %2186 = vmatprep.subr.bf16.mxu0 %v2171
        %2187 = vmatpush1.bf16.msra.mxu0 %v2170
        %2188 = vmatprep.subr.bf16.mxu0 %v2173
        %2189 = vmatpush1.bf16.msra.mxu0 %v2172
        %2190 = vmatprep.subr.bf16.mxu0 %v2175
        %2191 = vmatpush1.bf16.msra.mxu0 %v2174
        %2192 = vmatprep.subr.bf16.mxu0 %v2177
        %2193 = vmatpush1.bf16.msra.mxu0 %v2176
        %2194 = vmatprep.subr.bf16.mxu0 %v2179
        %2195 = vmatpush1.bf16.msra.mxu0 %v2178
        %2196 = vmatprep.subr.bf16.mxu0 %v2181
        %2197 = vmatpush1.bf16.msra.mxu0 %v2180
        %2198 = vmatprep.subr.bf16.mxu0 %v2183
        %2199 = vmatpush1.bf16.msra.mxu0 %v2182
        %2200 = vmatprep.subr.bf16.mxu0 %v2185
        %2201 = vmatpush1.bf16.msra.mxu0 %v2184
        %2202 = vmatprep.subr.bf16.mxu0 0
        %2203 = vmatpush1.bf16.msra.mxu0 0
        %2204 = vmatprep.subr.bf16.mxu0 0
        %2205 = vmatpush1.bf16.msra.mxu0 0
        %2206 = vmatprep.subr.bf16.mxu0 0
        %2207 = vmatpush1.bf16.msra.mxu0 0
        %2208 = vmatprep.subr.bf16.mxu0 0
        %2209 = vmatpush1.bf16.msra.mxu0 0
        %2210 = vmatprep.subr.bf16.mxu0 0
        %2211 = vmatpush1.bf16.msra.mxu0 0
        %2212 = vmatprep.subr.bf16.mxu0 0
        %2213 = vmatpush1.bf16.msra.mxu0 0
        %2214 = vmatprep.subr.bf16.mxu0 0
        %2215 = vmatpush1.bf16.msra.mxu0 0
        %2216 = vmatprep.subr.bf16.mxu0 0
        %2217 = vmatpush1.bf16.msra.mxu0 0
        %2218 = vmatprep.mubr.bf16.mxu0 0
        %2219 = vmatmul.mubr.bf16.gmra.mrb[0].mxu0 %v2169
        %v2220 = vpop.f32.mrb[0].mxu0
        %v2221 = vadd.f32 0.0, %v2220
        %v2222 = vpop.f32.mrb[0].mxu0
        %v2223 = vadd.f32 0.0, %v2222
        %v2224 = vpop.f32.mrb[0].mxu0
        %v2225 = vpop.f32.mrb[0].mxu0
        %2226 = vdwg.mxu0
        %v2229 = vcombine.low %v2221, %v2223
        %2231 = vst [vmem:[%s286] sm:$0xff] %v2229
        %s2232 = sand.u32 %s186, 1
        %s2233 = scalar_lea.sflag [#allocation7], %s2232
        %s2234 = sand.u32 %s186, 1
        %s2235 = smul.addr %s2234, 8
        %s2236 = scalar_lea.vmem [#allocation6], %s2235
        // Predicated region
        $region56: #{tpu_custom_call.1} parent=47 // pred_check
          %p2237 = pneg %p196
        $region57: #{tpu_custom_call.1} parent=47 // pred_check_branch
          %2239 = sbr.rel (%p2237) target = $region59
        $region58: #{tpu_custom_call.1} parent=47 // pred_region
          %s2241 = ssub.s32 128, 128
          %2242 = vsyncadd %s2233, %s2241
          %s2243 = smul.addr %s21, 2
          %s2244 = smul.addr %s2243, 64
          %s2245 = scalar_lea.hbm %s7, %s2244
          %s2247 = sshll.u32 %s2236, 4
          %s2248 = int_to_ptr.vmem [resolvable:$true] %s2247
          %2250 = dma.vmem_to_hbm [thread:$0]  %s2248, 128, %s2245, %s2233
        $region59: #{tpu_custom_call.1} parent=47 // pred_fallthru
          _
      $region48: #{tpu_custom_call.1} parent=5 // pred_fallthru
        _
      %p2251 = scmp.le.s32.totalorder 2, %s16
      // Predicated region
      $region60: #{tpu_custom_call.1} parent=5 // pred_check
        %p2252 = pneg %p2251
      $region61: #{tpu_custom_call.1} parent=5 // pred_check_branch
        %2254 = sbr.rel (%p2252) target = $region63
      $region62: #{tpu_custom_call.1} parent=5 // pred_region
        %s2255 = ssub.s32 %s16, 2
        // Predicated region
        $region64: #{tpu_custom_call.1} parent=62 // pred_check
          %p2256 = pneg %p202
        $region65: #{tpu_custom_call.1} parent=62 // pred_check_branch
          %2258 = sbr.rel (%p2256) target = $region67
        $region66: #{tpu_custom_call.1} parent=62 // pred_region
          %s2259 = sand.u32 %s187, 1
          %s2260 = scalar_lea.sflag [#allocation7], %s2259
          %s2261 = sand.u32 %s187, 1
          %s2262 = smul.addr %s2261, 8
          %s2263 = scalar_lea.vmem [#allocation6], %s2262
          %2264 = dma.done %s2260, 128
        $region67: #{tpu_custom_call.1} parent=62 // pred_fallthru
          _
      $region63: #{tpu_custom_call.1} parent=5 // pred_fallthru
        _
    $region6: #{tpu_custom_call.1} parent=1 // loop_footer
      %s20 = sadd.s32 1, %s16
    $region7: #{tpu_custom_call.1} parent=1 // loop_footer_branch
      %15 = sbr.rel target = $region3
    $region8: #{tpu_custom_call.1} parent=1 // loop_exit
      _
    %2265 = vsyncpa [#allocation7], 1
    %s2266 = scalar_lea.sflag [#allocation7], 1
    %2267 = vsyncpa %s2266, 1

</llo_original>
